<compile_context>
chip_gen: v7x
topology: tpu7x:2x2x1
jax: 0.10.0
libtpu: 0.0.40
codegen_flags: <defaults>
</compile_context>

<pallas_src>
import functools

import jax
import jax.numpy as jnp
from jax.experimental import pallas as pl
from jax.experimental.pallas import tpu as pltpu


# ----------------------------------------------------------------------------
# Kernels
# ----------------------------------------------------------------------------
def _assemble_window(x_ref, xh_ref, xbuf):
    """Build the zero-padded conv window for this (batch, seq-tile) in VMEM.

    xbuf rows [base, base + TL + 2*pad) hold input rows
    [t*TL - pad, t*TL + TL + pad) of this batch element.  Halo rows come from
    the per-batch halo slab xh_ref (1, nt, 2*pad, D) indexed by program_id(1)
    and are already zero at the global sequence boundaries.  `lead` keeps the
    bulk (TL, D) copy sublane-aligned; returns base = lead - pad.
    """
    TL = x_ref.shape[1]
    pad = xh_ref.shape[2] // 2
    lead = xbuf.shape[0] - TL - pad
    t = pl.program_id(1)

    xbuf[lead:lead + TL, :] = x_ref[0]                        # core rows (aligned copy)
    halo = xh_ref[0, t]                                       # (2*pad, D)
    xbuf[lead - pad:lead, :] = halo[0:pad, :]                 # left halo
    xbuf[lead + TL:lead + TL + pad, :] = halo[pad:2 * pad, :]  # right halo
    return lead - pad


def gated_conv_kernel_fused(x_ref, xh_ref, w_ref, b_ref, o_ref, xbuf):
    """D >= 128 path: single fused (K*D, 2D) RHS, chained per-tap MXU dots.

    No scratch accumulators: partial sums stay in the MXU result path / vregs
    and o_ref is written once.  The (TL, 2D) result is split at column D
    (free when D % 128 == 0).
    """
    _, TL, D = o_ref.shape
    K = w_ref.shape[0] // D
    base = _assemble_window(x_ref, xh_ref, xbuf)

    y = jnp.dot(xbuf[base:base + TL, :], w_ref[0:D, :],
                preferred_element_type=jnp.float32)
    for k in range(1, K):                                     # K is static -> unrolled
        y = y + jnp.dot(xbuf[base + k:base + k + TL, :],
                        w_ref[k * D:(k + 1) * D, :],
                        preferred_element_type=jnp.float32)
    y = y + b_ref[...]

    out = y[:, :D]
    gate = y[:, D:]
    sig = pl.reciprocal(1.0 + jnp.exp(-gate))                 # exp on EUP
    o_ref[0] = (out * sig).astype(o_ref.dtype)


def gated_conv_kernel_im2col(x_ref, xh_ref, wo_ref, wg_ref, bo_ref, bg_ref,
                             o_ref, xbuf, lhs_buf):
    """Small-D path (D < 128): stage an im2col lhs (TL, K*D) so the MXU sees
    one deep matmul per half instead of K shallow ones."""
    _, TL, D = o_ref.shape
    K = wo_ref.shape[0] // D
    base = _assemble_window(x_ref, xh_ref, xbuf)

    for k in range(K):
        lhs_buf[:, k * D:(k + 1) * D] = xbuf[base + k:base + k + TL, :]
    lhs = lhs_buf[...]

    o = jnp.dot(lhs, wo_ref[...], preferred_element_type=jnp.float32) + bo_ref[...]
    g = jnp.dot(lhs, wg_ref[...], preferred_element_type=jnp.float32) + bg_ref[...]
    o_ref[0] = (o * pl.reciprocal(1.0 + jnp.exp(-g))).astype(o_ref.dtype)


# ----------------------------------------------------------------------------
# Wrapper
# ----------------------------------------------------------------------------
def _pick_seq_tile(L, D, itemsize, requested=None, target_bytes=2 * 1024 * 1024):
    """Sequence-tile length: largest multiple of 8 dividing L that is <= a
    target sized so one (TL, D) tile is ~2 MiB (keeps the HBM pipeline near
    roofline while per-tile VMEM stays small).  Falls back to TL = L."""
    if requested is None:
        target = max(256, target_bytes // max(1, D * itemsize))
        target = min(int(target), 4096)
    else:
        target = int(requested)
    if L <= target:
        return L
    for tl in range(min(target, L), 7, -1):
        if L % tl == 0 and tl % 8 == 0:
            return tl
    return L


def gated_convolution(x, weight, bias, padding=1, seq_tile=None):
    """One GatedConvolution layer.

    x      : (B, L, D)       activations (f32 or bf16)
    weight : (2D, D, K)      PyTorch Conv1d weight layout
    bias   : (2D,)
    """
    B, L, D = x.shape
    two_d, d_in, K = weight.shape
    assert two_d == 2 * D and d_in == D
    assert padding >= 1 and 2 * padding == K - 1, "kernel assumes 'same'-length conv"

    pad = padding
    itemsize = jnp.dtype(x.dtype).itemsize
    TL = _pick_seq_tile(L, D, itemsize, requested=seq_tile)
    assert L % TL == 0
    nt = L // TL
    assert pad <= TL, "halo scheme requires padding <= seq tile"

    # (2D, D, K) -> tap-major (K, D, 2D); tap k occupies weight rows
    # [k*D, (k+1)*D); columns [:D] are the 'out' half, [D:] the 'gate' half.
    wt = jnp.transpose(weight, (2, 1, 0))                     # (K, D, 2D)

    # Tiny per-batch halo slab (B, nt, 2*pad, D) with zeros at the global
    # sequence boundaries -- avoids jnp.pad'ing the full activation in HBM.
    xr = x.reshape(B, nt, TL, D)
    zeros = jnp.zeros((B, 1, pad, D), x.dtype)
    left = jnp.concatenate([zeros, xr[:, :-1, TL - pad:, :]], axis=1)
    right = jnp.concatenate([xr[:, 1:, :pad, :], zeros], axis=1)
    xh = jnp.concatenate([left, right], axis=2)               # (B, nt, 2*pad, D)

    lead = -(-pad // 16) * 16          # sublane-aligned start of the bulk copy
    win = lead + TL + pad

    use_im2col = D < 128
    if use_im2col:
        wo = wt[:, :, :D].reshape(K * D, D).astype(x.dtype)
        wg = wt[:, :, D:].reshape(K * D, D).astype(x.dtype)
        bo = bias[:D].reshape(1, D).astype(jnp.float32)
        bg = bias[D:].reshape(1, D).astype(jnp.float32)
        kernel = gated_conv_kernel_im2col
        weight_args = (wo, wg, bo, bg)
        weight_specs = [
            pl.BlockSpec((K * D, D), lambda b, t: (0, 0)),     # W_out
            pl.BlockSpec((K * D, D), lambda b, t: (0, 0)),     # W_gate
            pl.BlockSpec((1, D), lambda b, t: (0, 0)),         # b_out
            pl.BlockSpec((1, D), lambda b, t: (0, 0)),         # b_gate
        ]
        scratch = [pltpu.VMEM((win, D), x.dtype),
                   pltpu.VMEM((TL, K * D), x.dtype)]
    else:
        # Fused RHS: each tap's matmul produces the full (TL, 2D) row block;
        # fills the 256-wide v6e/v7x MXU and halves matmul issue count.
        w_all = wt.reshape(K * D, 2 * D).astype(x.dtype)
        b_all = bias.reshape(1, 2 * D).astype(jnp.float32)
        kernel = gated_conv_kernel_fused
        weight_args = (w_all, b_all)
        weight_specs = [
            pl.BlockSpec((K * D, 2 * D), lambda b, t: (0, 0)),  # W (fused)
            pl.BlockSpec((1, 2 * D), lambda b, t: (0, 0)),      # bias (fused)
        ]
        scratch = [pltpu.VMEM((win, D), x.dtype)]

    return pl.pallas_call(
        kernel,
        out_shape=jax.ShapeDtypeStruct((B, L, D), x.dtype),
        grid_spec=pltpu.PrefetchScalarGridSpec(
            num_scalar_prefetch=0,
            grid=(B, nt),
            in_specs=[
                pl.BlockSpec((1, TL, D), lambda b, t: (b, t, 0)),          # x tile
                pl.BlockSpec((1, nt, 2 * pad, D), lambda b, t: (b, 0, 0, 0)),  # halo slab
                *weight_specs,
            ],
            out_specs=pl.BlockSpec((1, TL, D), lambda b, t: (b, t, 0)),
            scratch_shapes=scratch,
        ),
        compiler_params=pltpu.CompilerParams(
            dimension_semantics=("parallel", "parallel"),
            vmem_limit_bytes=48 * 1024 * 1024),
    )(x, xh, *weight_args)


@functools.partial(jax.jit, static_argnames=("padding", "seq_tile"))
def glu_forward(x, params, padding=1, seq_tile=None):
    for w, b in params:
        x = gated_convolution(x, w, b, padding=padding, seq_tile=seq_tile)
    return x


# ----------------------------------------------------------------------------
# Params / reference
# ----------------------------------------------------------------------------
def init_glu_params(key, d_model, num_layers, patch_size=3):
    """Deterministic init matching nn.Conv1d + xavier_uniform_ distributions."""
    params = []
    fan_in = d_model * patch_size
    fan_out = 2 * d_model * patch_size
    w_bound = (6.0 / (fan_in + fan_out)) ** 0.5            # xavier_uniform, gain=1
    b_bound = 1.0 / (fan_in ** 0.5)                        # default Conv1d bias init
    for _ in range(num_layers):
        key, kw, kb = jax.random.split(key, 3)
        w = jax.random.uniform(kw, (2 * d_model, d_model, patch_size),
                               jnp.float32, -w_bound, w_bound)
        b = jax.random.uniform(kb, (2 * d_model,), jnp.float32,
                               -b_bound, b_bound)
        params.append((w, b))
    return params


def _reference_forward(x, params, padding=1):
    """Pure-JAX reference of the PyTorch semantics."""
    for w, b in params:
        D = x.shape[-1]
        K = w.shape[-1]
        L = x.shape[1]
        xp = jnp.pad(x, ((0, 0), (padding, padding), (0, 0)))
        y = b[None, None, :].astype(jnp.float32)
        for k in range(K):
            y = y + jnp.einsum("blc,oc->blo", xp[:, k:k + L, :], w[:, :, k],
                               precision=jax.lax.Precision.HIGHEST)
        out, gate = y[..., :D], y[..., D:]
        x = (out * jax.nn.sigmoid(gate)).astype(x.dtype)
    return x


# ----------------------------------------------------------------------------
# Self-test
# ----------------------------------------------------------------------------
if __name__ == "__main__":
    key = jax.random.PRNGKey(0)
    patch_size, padding = 3, 1

    # Config 1: D < 128 -> im2col path; seq_tile=16 over L=32 exercises halos.
    B, L, D = 2, 32, 32
    key, kx = jax.random.split(key)
    x = jax.random.normal(kx, (B, L, D), jnp.float32)
    params = init_glu_params(key, D, num_layers=2, patch_size=patch_size)

    out = jax.block_until_ready(glu_forward(x, params, padding=padding, seq_tile=16))
    ref = _reference_forward(x, params, padding=padding)
    assert out.shape == (B, L, D)
    assert jnp.allclose(out, ref, atol=1e-4, rtol=1e-4)

    # Same config with bf16 activations/weights (f32 accumulation in-kernel).
    out_bf16 = jax.block_until_ready(
        glu_forward(x.astype(jnp.bfloat16), params, padding=padding, seq_tile=16))
    assert out_bf16.dtype == jnp.bfloat16
    assert bool(jnp.all(jnp.isfinite(out_bf16.astype(jnp.float32))))
    assert float(jnp.mean(jnp.abs(out_bf16.astype(jnp.float32) - ref))) < 5e-2

    # Config 2: D = 128 -> fused (K*D, 2D) RHS path; multi-tile and auto-tile.
    B2, L2, D2 = 2, 32, 128
    key, kx2 = jax.random.split(key)
    x2 = jax.random.normal(kx2, (B2, L2, D2), jnp.float32)
    params2 = init_glu_params(key, D2, num_layers=1, patch_size=patch_size)
    ref2 = _reference_forward(x2, params2, padding=padding)

    out2 = jax.block_until_ready(glu_forward(x2, params2, padding=padding, seq_tile=16))
    assert jnp.allclose(out2, ref2, atol=1e-4, rtol=1e-4)

    out2_auto = jax.block_until_ready(glu_forward(x2, params2, padding=padding))
    assert jnp.allclose(out2_auto, ref2, atol=1e-4, rtol=1e-4)

    print("KERNEL_OK")
</pallas_src>

<mosaic_0001>
module attributes {stable_mosaic.version = 11 : i64} {
  func.func @gated_conv_kernel_im2col(%arg0: i32, %arg1: i32, %arg2: memref<1x16x32xf32, #tpu.memory_space<vmem>>, %arg3: memref<1x2x2x32xf32, #tpu.memory_space<vmem>>, %arg4: memref<96x32xf32, #tpu.memory_space<vmem>>, %arg5: memref<96x32xf32, #tpu.memory_space<vmem>>, %arg6: memref<1x32xf32, #tpu.memory_space<vmem>>, %arg7: memref<1x32xf32, #tpu.memory_space<vmem>>, %arg8: memref<1x16x32xf32, #tpu.memory_space<vmem>>, %arg9: memref<33x32xf32, #tpu.memory_space<vmem>>, %arg10: memref<16x96xf32, #tpu.memory_space<vmem>>) attributes {dimension_semantics = [#tpu.dimension_semantics<parallel>, #tpu.dimension_semantics<parallel>], iteration_bounds = array<i64: 2, 2>, scalar_prefetch = 0 : i64, scratch_operands = 2 : i64, tpu.core_type = #tpu.core_type<tc>, window_params = [{transform_indices = @transform_0, window_bounds = array<i64: 1, 16, 32>}, {transform_indices = @transform_1, window_bounds = array<i64: 1, 2, 2, 32>}, {pipeline_mode = #tpu.pipeline_mode<synchronous>, transform_indices = @transform_2, window_bounds = array<i64: 96, 32>}, {pipeline_mode = #tpu.pipeline_mode<synchronous>, transform_indices = @transform_3, window_bounds = array<i64: 96, 32>}, {pipeline_mode = #tpu.pipeline_mode<synchronous>, transform_indices = @transform_4, window_bounds = array<i64: 1, 32>}, {pipeline_mode = #tpu.pipeline_mode<synchronous>, transform_indices = @transform_5, window_bounds = array<i64: 1, 32>}, {transform_indices = @transform_6, window_bounds = array<i64: 1, 16, 32>}]} {
    %c0 = arith.constant 0 : index
    %c0_0 = arith.constant 0 : index
    %c0_1 = arith.constant 0 : index
    %0 = vector.load %arg2[%c0, %c0_0, %c0_1] : memref<1x16x32xf32, #tpu.memory_space<vmem>>, vector<1x16x32xf32>
    %1 = vector.shape_cast %0 : vector<1x16x32xf32> to vector<16x32xf32>
    %c16 = arith.constant 16 : index
    %c0_2 = arith.constant 0 : index
    %2 = vector.load %arg9[%c16, %c0_2] : memref<33x32xf32, #tpu.memory_space<vmem>>, vector<16x32xf32>
    tpu.vector_store %arg9[%c16, %c0_2], %1 {strides = array<i32>} : memref<33x32xf32, #tpu.memory_space<vmem>>, vector<16x32xf32>,
    %c0_3 = arith.constant 0 : index
    %3 = arith.index_cast %arg1 : i32 to index
    %c0_4 = arith.constant 0 : index
    %c0_5 = arith.constant 0 : index
    %4 = vector.load %arg3[%c0_3, %3, %c0_4, %c0_5] : memref<1x2x2x32xf32, #tpu.memory_space<vmem>>, vector<1x1x2x32xf32>
    %5 = vector.shape_cast %4 : vector<1x1x2x32xf32> to vector<2x32xf32>
    %6 = vector.extract_strided_slice %5 {offsets = [0, 0], sizes = [1, 32], strides = [1, 1]} : vector<2x32xf32> to vector<1x32xf32>
    %c15 = arith.constant 15 : index
    %c0_6 = arith.constant 0 : index
    %7 = vector.load %arg9[%c15, %c0_6] : memref<33x32xf32, #tpu.memory_space<vmem>>, vector<1x32xf32>
    tpu.vector_store %arg9[%c15, %c0_6], %6 {strides = array<i32>} : memref<33x32xf32, #tpu.memory_space<vmem>>, vector<1x32xf32>,
    %8 = vector.extract_strided_slice %5 {offsets = [1, 0], sizes = [1, 32], strides = [1, 1]} : vector<2x32xf32> to vector<1x32xf32>
    %c32 = arith.constant 32 : index
    %c0_7 = arith.constant 0 : index
    %9 = vector.load %arg9[%c32, %c0_7] : memref<33x32xf32, #tpu.memory_space<vmem>>, vector<1x32xf32>
    tpu.vector_store %arg9[%c32, %c0_7], %8 {strides = array<i32>} : memref<33x32xf32, #tpu.memory_space<vmem>>, vector<1x32xf32>,
    %c15_8 = arith.constant 15 : index
    %c0_9 = arith.constant 0 : index
    %10 = vector.load %arg9[%c15_8, %c0_9] : memref<33x32xf32, #tpu.memory_space<vmem>>, vector<16x32xf32>
    %c0_10 = arith.constant 0 : index
    %c0_11 = arith.constant 0 : index
    %11 = vector.load %arg10[%c0_10, %c0_11] : memref<16x96xf32, #tpu.memory_space<vmem>>, vector<16x32xf32>
    tpu.vector_store %arg10[%c0_10, %c0_11], %10 {strides = array<i32>} : memref<16x96xf32, #tpu.memory_space<vmem>>, vector<16x32xf32>,
    %c16_12 = arith.constant 16 : index
    %c0_13 = arith.constant 0 : index
    %12 = vector.load %arg9[%c16_12, %c0_13] : memref<33x32xf32, #tpu.memory_space<vmem>>, vector<16x32xf32>
    %c0_14 = arith.constant 0 : index
    %c32_15 = arith.constant 32 : index
    %13 = vector.load %arg10[%c0_14, %c32_15] : memref<16x96xf32, #tpu.memory_space<vmem>>, vector<16x32xf32>
    tpu.vector_store %arg10[%c0_14, %c32_15], %12 {strides = array<i32>} : memref<16x96xf32, #tpu.memory_space<vmem>>, vector<16x32xf32>,
    %c17 = arith.constant 17 : index
    %c0_16 = arith.constant 0 : index
    %14 = vector.load %arg9[%c17, %c0_16] : memref<33x32xf32, #tpu.memory_space<vmem>>, vector<16x32xf32>
    %c0_17 = arith.constant 0 : index
    %c64 = arith.constant 64 : index
    %15 = vector.load %arg10[%c0_17, %c64] : memref<16x96xf32, #tpu.memory_space<vmem>>, vector<16x32xf32>
    tpu.vector_store %arg10[%c0_17, %c64], %14 {strides = array<i32>} : memref<16x96xf32, #tpu.memory_space<vmem>>, vector<16x32xf32>,
    %c0_18 = arith.constant 0 : index
    %c0_19 = arith.constant 0 : index
    %16 = vector.load %arg10[%c0_18, %c0_19] : memref<16x96xf32, #tpu.memory_space<vmem>>, vector<16x96xf32>
    %c0_20 = arith.constant 0 : index
    %c0_21 = arith.constant 0 : index
    %17 = vector.load %arg4[%c0_20, %c0_21] : memref<96x32xf32, #tpu.memory_space<vmem>>, vector<96x32xf32>
    %cst = arith.constant dense<0.000000e+00> : vector<16x32xf32>
    %18 = tpu.matmul %16, %17, %cst {dimension_numbers = #tpu.dot_dimension_numbers<[1], [0], [0], [1], [0, 0, 1, 1], [], []>} : vector<16x96xf32>, vector<96x32xf32>, vector<16x32xf32> -> vector<16x32xf32>
    %c0_22 = arith.constant 0 : index
    %c0_23 = arith.constant 0 : index
    %19 = vector.load %arg6[%c0_22, %c0_23] : memref<1x32xf32, #tpu.memory_space<vmem>>, vector<1x32xf32>
    %20 = vector.broadcast %19 : vector<1x32xf32> to vector<16x32xf32>
    %21 = arith.addf %18, %20 : vector<16x32xf32>
    %c0_24 = arith.constant 0 : index
    %c0_25 = arith.constant 0 : index
    %22 = vector.load %arg5[%c0_24, %c0_25] : memref<96x32xf32, #tpu.memory_space<vmem>>, vector<96x32xf32>
    %cst_26 = arith.constant dense<0.000000e+00> : vector<16x32xf32>
    %23 = tpu.matmul %16, %22, %cst_26 {dimension_numbers = #tpu.dot_dimension_numbers<[1], [0], [0], [1], [0, 0, 1, 1], [], []>} : vector<16x96xf32>, vector<96x32xf32>, vector<16x32xf32> -> vector<16x32xf32>
    %c0_27 = arith.constant 0 : index
    %c0_28 = arith.constant 0 : index
    %24 = vector.load %arg7[%c0_27, %c0_28] : memref<1x32xf32, #tpu.memory_space<vmem>>, vector<1x32xf32>
    %25 = vector.broadcast %24 : vector<1x32xf32> to vector<16x32xf32>
    %26 = arith.addf %23, %25 : vector<16x32xf32>
    %cst_29 = arith.constant 0.000000e+00 : f32
    %27 = vector.broadcast %cst_29 : f32 to vector<16x32xf32>
    %28 = arith.subf %27, %26 : vector<16x32xf32>
    %29 = math.exp %28 : vector<16x32xf32>
    %cst_30 = arith.constant 1.000000e+00 : f32
    %30 = vector.broadcast %cst_30 : f32 to vector<16x32xf32>
    %31 = arith.addf %30, %29 : vector<16x32xf32>
    %32 = tpu.reciprocal %31 : vector<16x32xf32> -> vector<16x32xf32>
    %33 = arith.mulf %21, %32 : vector<16x32xf32>
    %c0_31 = arith.constant 0 : index
    %c0_32 = arith.constant 0 : index
    %c0_33 = arith.constant 0 : index
    %34 = vector.load %arg8[%c0_31, %c0_32, %c0_33] : memref<1x16x32xf32, #tpu.memory_space<vmem>>, vector<1x16x32xf32>
    %35 = vector.shape_cast %34 : vector<1x16x32xf32> to vector<16x32xf32>
    %36 = vector.shape_cast %33 : vector<16x32xf32> to vector<1x16x32xf32>
    tpu.vector_store %arg8[%c0_31, %c0_32, %c0_33], %36 {strides = array<i32>} : memref<1x16x32xf32, #tpu.memory_space<vmem>>, vector<1x16x32xf32>,
    return
  }
  func.func @transform_0(%arg0: i32, %arg1: i32) -> (i32, i32, i32) {
    %c0_i32 = arith.constant 0 : i32
    %c0_i32_0 = arith.constant 0 : i32
    return %arg0, %arg1, %c0_i32 : i32, i32, i32
  }
  func.func @transform_1(%arg0: i32, %arg1: i32) -> (i32, i32, i32, i32) {
    %c0_i32 = arith.constant 0 : i32
    %c0_i32_0 = arith.constant 0 : i32
    %c0_i32_1 = arith.constant 0 : i32
    %c0_i32_2 = arith.constant 0 : i32
    return %arg0, %c0_i32, %c0_i32_0, %c0_i32_1 : i32, i32, i32, i32
  }
  func.func @transform_2(%arg0: i32, %arg1: i32) -> (i32, i32) {
    %c0_i32 = arith.constant 0 : i32
    %c0_i32_0 = arith.constant 0 : i32
    %c0_i32_1 = arith.constant 0 : i32
    return %c0_i32, %c0_i32_0 : i32, i32
  }
  func.func @transform_3(%arg0: i32, %arg1: i32) -> (i32, i32) {
    %c0_i32 = arith.constant 0 : i32
    %c0_i32_0 = arith.constant 0 : i32
    %c0_i32_1 = arith.constant 0 : i32
    return %c0_i32, %c0_i32_0 : i32, i32
  }
  func.func @transform_4(%arg0: i32, %arg1: i32) -> (i32, i32) {
    %c0_i32 = arith.constant 0 : i32
    %c0_i32_0 = arith.constant 0 : i32
    %c0_i32_1 = arith.constant 0 : i32
    return %c0_i32, %c0_i32_0 : i32, i32
  }
  func.func @transform_5(%arg0: i32, %arg1: i32) -> (i32, i32) {
    %c0_i32 = arith.constant 0 : i32
    %c0_i32_0 = arith.constant 0 : i32
    %c0_i32_1 = arith.constant 0 : i32
    return %c0_i32, %c0_i32_0 : i32, i32
  }
  func.func @transform_6(%arg0: i32, %arg1: i32) -> (i32, i32, i32) {
    %c0_i32 = arith.constant 0 : i32
    %c0_i32_0 = arith.constant 0 : i32
    return %arg0, %arg1, %c0_i32 : i32, i32, i32
  }
}

module attributes {stable_mosaic.version = 11 : i64} {
  func.func @gated_conv_kernel_im2col(%arg0: i32, %arg1: i32, %arg2: memref<1x16x32xf32, #tpu.memory_space<vmem>>, %arg3: memref<1x2x2x32xf32, #tpu.memory_space<vmem>>, %arg4: memref<96x32xf32, #tpu.memory_space<vmem>>, %arg5: memref<96x32xf32, #tpu.memory_space<vmem>>, %arg6: memref<1x32xf32, #tpu.memory_space<vmem>>, %arg7: memref<1x32xf32, #tpu.memory_space<vmem>>, %arg8: memref<1x16x32xf32, #tpu.memory_space<vmem>>, %arg9: memref<33x32xf32, #tpu.memory_space<vmem>>, %arg10: memref<16x96xf32, #tpu.memory_space<vmem>>) attributes {dimension_semantics = [#tpu.dimension_semantics<parallel>, #tpu.dimension_semantics<parallel>], iteration_bounds = array<i64: 2, 2>, scalar_prefetch = 0 : i64, scratch_operands = 2 : i64, tpu.core_type = #tpu.core_type<tc>, window_params = [{transform_indices = @transform_0, window_bounds = array<i64: 1, 16, 32>}, {transform_indices = @transform_1, window_bounds = array<i64: 1, 2, 2, 32>}, {pipeline_mode = #tpu.pipeline_mode<synchronous>, transform_indices = @transform_2, window_bounds = array<i64: 96, 32>}, {pipeline_mode = #tpu.pipeline_mode<synchronous>, transform_indices = @transform_3, window_bounds = array<i64: 96, 32>}, {pipeline_mode = #tpu.pipeline_mode<synchronous>, transform_indices = @transform_4, window_bounds = array<i64: 1, 32>}, {pipeline_mode = #tpu.pipeline_mode<synchronous>, transform_indices = @transform_5, window_bounds = array<i64: 1, 32>}, {transform_indices = @transform_6, window_bounds = array<i64: 1, 16, 32>}]} {
    %c0 = arith.constant 0 : index
    %c0_0 = arith.constant 0 : index
    %c0_1 = arith.constant 0 : index
    %0 = vector.load %arg2[%c0, %c0_0, %c0_1] : memref<1x16x32xf32, #tpu.memory_space<vmem>>, vector<1x16x32xf32>
    %1 = vector.shape_cast %0 : vector<1x16x32xf32> to vector<16x32xf32>
    %c16 = arith.constant 16 : index
    %c0_2 = arith.constant 0 : index
    %2 = vector.load %arg9[%c16, %c0_2] : memref<33x32xf32, #tpu.memory_space<vmem>>, vector<16x32xf32>
    tpu.vector_store %arg9[%c16, %c0_2], %1 {strides = array<i32>} : memref<33x32xf32, #tpu.memory_space<vmem>>, vector<16x32xf32>,
    %c0_3 = arith.constant 0 : index
    %3 = arith.index_cast %arg1 : i32 to index
    %c0_4 = arith.constant 0 : index
    %c0_5 = arith.constant 0 : index
    %4 = vector.load %arg3[%c0_3, %3, %c0_4, %c0_5] : memref<1x2x2x32xf32, #tpu.memory_space<vmem>>, vector<1x1x2x32xf32>
    %5 = vector.shape_cast %4 : vector<1x1x2x32xf32> to vector<2x32xf32>
    %6 = vector.extract_strided_slice %5 {offsets = [0, 0], sizes = [1, 32], strides = [1, 1]} : vector<2x32xf32> to vector<1x32xf32>
    %c15 = arith.constant 15 : index
    %c0_6 = arith.constant 0 : index
    %7 = vector.load %arg9[%c15, %c0_6] : memref<33x32xf32, #tpu.memory_space<vmem>>, vector<1x32xf32>
    tpu.vector_store %arg9[%c15, %c0_6], %6 {strides = array<i32>} : memref<33x32xf32, #tpu.memory_space<vmem>>, vector<1x32xf32>,
    %8 = vector.extract_strided_slice %5 {offsets = [1, 0], sizes = [1, 32], strides = [1, 1]} : vector<2x32xf32> to vector<1x32xf32>
    %c32 = arith.constant 32 : index
    %c0_7 = arith.constant 0 : index
    %9 = vector.load %arg9[%c32, %c0_7] : memref<33x32xf32, #tpu.memory_space<vmem>>, vector<1x32xf32>
    tpu.vector_store %arg9[%c32, %c0_7], %8 {strides = array<i32>} : memref<33x32xf32, #tpu.memory_space<vmem>>, vector<1x32xf32>,
    %c15_8 = arith.constant 15 : index
    %c0_9 = arith.constant 0 : index
    %10 = vector.load %arg9[%c15_8, %c0_9] : memref<33x32xf32, #tpu.memory_space<vmem>>, vector<16x32xf32>
    %c0_10 = arith.constant 0 : index
    %c0_11 = arith.constant 0 : index
    %11 = vector.load %arg10[%c0_10, %c0_11] : memref<16x96xf32, #tpu.memory_space<vmem>>, vector<16x32xf32>
    tpu.vector_store %arg10[%c0_10, %c0_11], %10 {strides = array<i32>} : memref<16x96xf32, #tpu.memory_space<vmem>>, vector<16x32xf32>,
    %c16_12 = arith.constant 16 : index
    %c0_13 = arith.constant 0 : index
    %12 = vector.load %arg9[%c16_12, %c0_13] : memref<33x32xf32, #tpu.memory_space<vmem>>, vector<16x32xf32>
    %c0_14 = arith.constant 0 : index
    %c32_15 = arith.constant 32 : index
    %13 = vector.load %arg10[%c0_14, %c32_15] : memref<16x96xf32, #tpu.memory_space<vmem>>, vector<16x32xf32>
    tpu.vector_store %arg10[%c0_14, %c32_15], %12 {strides = array<i32>} : memref<16x96xf32, #tpu.memory_space<vmem>>, vector<16x32xf32>,
    %c17 = arith.constant 17 : index
    %c0_16 = arith.constant 0 : index
    %14 = vector.load %arg9[%c17, %c0_16] : memref<33x32xf32, #tpu.memory_space<vmem>>, vector<16x32xf32>
    %c0_17 = arith.constant 0 : index
    %c64 = arith.constant 64 : index
    %15 = vector.load %arg10[%c0_17, %c64] : memref<16x96xf32, #tpu.memory_space<vmem>>, vector<16x32xf32>
    tpu.vector_store %arg10[%c0_17, %c64], %14 {strides = array<i32>} : memref<16x96xf32, #tpu.memory_space<vmem>>, vector<16x32xf32>,
    %c0_18 = arith.constant 0 : index
    %c0_19 = arith.constant 0 : index
    %16 = vector.load %arg10[%c0_18, %c0_19] : memref<16x96xf32, #tpu.memory_space<vmem>>, vector<16x96xf32>
    %c0_20 = arith.constant 0 : index
    %c0_21 = arith.constant 0 : index
    %17 = vector.load %arg4[%c0_20, %c0_21] : memref<96x32xf32, #tpu.memory_space<vmem>>, vector<96x32xf32>
    %cst = arith.constant dense<0.000000e+00> : vector<16x32xf32>
    %18 = tpu.matmul %16, %17, %cst {dimension_numbers = #tpu.dot_dimension_numbers<[1], [0], [0], [1], [0, 0, 1, 1], [], []>} : vector<16x96xf32>, vector<96x32xf32>, vector<16x32xf32> -> vector<16x32xf32>
    %c0_22 = arith.constant 0 : index
    %c0_23 = arith.constant 0 : index
    %19 = vector.load %arg6[%c0_22, %c0_23] : memref<1x32xf32, #tpu.memory_space<vmem>>, vector<1x32xf32>
    %20 = vector.broadcast %19 : vector<1x32xf32> to vector<16x32xf32>
    %21 = arith.addf %18, %20 : vector<16x32xf32>
    %c0_24 = arith.constant 0 : index
    %c0_25 = arith.constant 0 : index
    %22 = vector.load %arg5[%c0_24, %c0_25] : memref<96x32xf32, #tpu.memory_space<vmem>>, vector<96x32xf32>
    %cst_26 = arith.constant dense<0.000000e+00> : vector<16x32xf32>
    %23 = tpu.matmul %16, %22, %cst_26 {dimension_numbers = #tpu.dot_dimension_numbers<[1], [0], [0], [1], [0, 0, 1, 1], [], []>} : vector<16x96xf32>, vector<96x32xf32>, vector<16x32xf32> -> vector<16x32xf32>
    %c0_27 = arith.constant 0 : index
    %c0_28 = arith.constant 0 : index
    %24 = vector.load %arg7[%c0_27, %c0_28] : memref<1x32xf32, #tpu.memory_space<vmem>>, vector<1x32xf32>
    %25 = vector.broadcast %24 : vector<1x32xf32> to vector<16x32xf32>
    %26 = arith.addf %23, %25 : vector<16x32xf32>
    %cst_29 = arith.constant 0.000000e+00 : f32
    %27 = vector.broadcast %cst_29 : f32 to vector<16x32xf32>
    %28 = arith.subf %27, %26 : vector<16x32xf32>
    %29 = math.exp %28 : vector<16x32xf32>
    %cst_30 = arith.constant 1.000000e+00 : f32
    %30 = vector.broadcast %cst_30 : f32 to vector<16x32xf32>
    %31 = arith.addf %30, %29 : vector<16x32xf32>
    %32 = tpu.reciprocal %31 : vector<16x32xf32> -> vector<16x32xf32>
    %33 = arith.mulf %21, %32 : vector<16x32xf32>
    %c0_31 = arith.constant 0 : index
    %c0_32 = arith.constant 0 : index
    %c0_33 = arith.constant 0 : index
    %34 = vector.load %arg8[%c0_31, %c0_32, %c0_33] : memref<1x16x32xf32, #tpu.memory_space<vmem>>, vector<1x16x32xf32>
    %35 = vector.shape_cast %34 : vector<1x16x32xf32> to vector<16x32xf32>
    %36 = vector.shape_cast %33 : vector<16x32xf32> to vector<1x16x32xf32>
    tpu.vector_store %arg8[%c0_31, %c0_32, %c0_33], %36 {strides = array<i32>} : memref<1x16x32xf32, #tpu.memory_space<vmem>>, vector<1x16x32xf32>,
    return
  }
  func.func @transform_0(%arg0: i32, %arg1: i32) -> (i32, i32, i32) {
    %c0_i32 = arith.constant 0 : i32
    %c0_i32_0 = arith.constant 0 : i32
    return %arg0, %arg1, %c0_i32 : i32, i32, i32
  }
  func.func @transform_1(%arg0: i32, %arg1: i32) -> (i32, i32, i32, i32) {
    %c0_i32 = arith.constant 0 : i32
    %c0_i32_0 = arith.constant 0 : i32
    %c0_i32_1 = arith.constant 0 : i32
    %c0_i32_2 = arith.constant 0 : i32
    return %arg0, %c0_i32, %c0_i32_0, %c0_i32_1 : i32, i32, i32, i32
  }
  func.func @transform_2(%arg0: i32, %arg1: i32) -> (i32, i32) {
    %c0_i32 = arith.constant 0 : i32
    %c0_i32_0 = arith.constant 0 : i32
    %c0_i32_1 = arith.constant 0 : i32
    return %c0_i32, %c0_i32_0 : i32, i32
  }
  func.func @transform_3(%arg0: i32, %arg1: i32) -> (i32, i32) {
    %c0_i32 = arith.constant 0 : i32
    %c0_i32_0 = arith.constant 0 : i32
    %c0_i32_1 = arith.constant 0 : i32
    return %c0_i32, %c0_i32_0 : i32, i32
  }
  func.func @transform_4(%arg0: i32, %arg1: i32) -> (i32, i32) {
    %c0_i32 = arith.constant 0 : i32
    %c0_i32_0 = arith.constant 0 : i32
    %c0_i32_1 = arith.constant 0 : i32
    return %c0_i32, %c0_i32_0 : i32, i32
  }
  func.func @transform_5(%arg0: i32, %arg1: i32) -> (i32, i32) {
    %c0_i32 = arith.constant 0 : i32
    %c0_i32_0 = arith.constant 0 : i32
    %c0_i32_1 = arith.constant 0 : i32
    return %c0_i32, %c0_i32_0 : i32, i32
  }
  func.func @transform_6(%arg0: i32, %arg1: i32) -> (i32, i32, i32) {
    %c0_i32 = arith.constant 0 : i32
    %c0_i32_0 = arith.constant 0 : i32
    return %arg0, %arg1, %c0_i32 : i32, i32, i32
  }
}

</mosaic_0001>

<llo_original>
// kernel: glu_forward.2
$region0: #{glu_forward.2}
  #allocation0 [shape = 'u32[]', space=smem, size = 0x4, offset = 0x4, fixed_abs, tag = 'smem constant byte address 0x4 - core index']
  #allocation1 [shape = 'u32[144,128]{1,0:T(1,128)}', space=vmem, size = 0x12000, scoped, tag = 'internal scratch']
  #allocation2 [shape = 'f32[33,32]{1,0:T(8,128)}', space=vmem, size = 0x5000, scoped, tag = 'scratch operand']
  #allocation3 [shape = 'f32[16,96]{1,0:T(8,128)}', space=vmem, size = 0x2000, scoped, tag = 'scratch operand']
  %s0 = inlined_call_operand.vmem [shape: f32[2,32,32], index: 0, kind: input, shape index: {}]
  %s1 = inlined_call_operand.vmem [shape: f32[2,2,2,32], index: 1, kind: input, shape index: {}]
  %s2 = inlined_call_operand.vmem [shape: f32[96,32], index: 2, kind: input, shape index: {}]
  %s3 = inlined_call_operand.vmem [shape: f32[96,32], index: 3, kind: input, shape index: {}]
  %s4 = inlined_call_operand.vmem [shape: f32[1,32], index: 4, kind: input, shape index: {}]
  %s5 = inlined_call_operand.vmem [shape: f32[1,32], index: 5, kind: input, shape index: {}]
  %s6 = inlined_call_operand.vmem [shape: f32[2,32,32], index: 6, kind: output, shape index: {}]
  %s7 = sld [smem:[#allocation0]]
  $region57: #{glu_forward.2} parent=0
    _
  %s9 = ssub.s32 1, %s7
  %s10 = scalar_select 0, %s9, %s7
  loop: start=0, step=1, limit=6
  $region2: #{glu_forward.2} parent=0 // loop_pre_header
    _
  $region3: #{glu_forward.2} parent=0 // loop_header
    %s12 = sphi 0, %s16
    %p13 = scmp.ge.s32.totalorder %s12, 6
    %s19 = sphi 0, %s31
    %s20 = sphi 0, %s27
    %s21 = sphi 0, %s19
    %s22 = sphi 0, %s20
    %s23 = sphi 0, %s21
    %s24 = sphi 0, %s22
    %s36 = sphi 0, %s38
    %s39 = sphi 0, %s36
    %s40 = sphi 0, %s39
    %s56 = sphi 0, %s40
    %s62 = sphi 0, %s64
    %s65 = sphi 0, %s62
    %s66 = sphi 0, %s65
    %s82 = sphi 0, %s66
    %s86 = sphi 0, %s86
    %s88 = sphi 0, %s86
    %s89 = sphi 0, %s88
    %s103 = sphi 0, %s89
    %s107 = sphi 0, %s107
    %s109 = sphi 0, %s107
    %s110 = sphi 0, %s109
    %s124 = sphi 0, %s110
    %s128 = sphi 0, %s128
    %s130 = sphi 0, %s128
    %s131 = sphi 0, %s130
    %s145 = sphi 0, %s131
    %s149 = sphi 0, %s149
    %s151 = sphi 0, %s149
    %s152 = sphi 0, %s151
    %s166 = sphi 0, %s152
    %s174 = sphi 0, %s176
    %s177 = sphi 0, %s174
    %s178 = sphi 0, %s177
    %s194 = sphi 0, %s178
  $region4: #{glu_forward.2} parent=0 // loop_header_branch
    %15 = sbr.rel (%p13) target = $region8
  $region5: #{glu_forward.2} parent=0 // loop_body
    %s17 = ssub.s32 %s12, 1
    %s18 = ssub.s32 %s12, 2
    %s25 = sadd.s32 1, %s20
    %p26 = scmp.ge.s32.totalorder %s25, 2
    %s27 = scalar_select %p26, 0, %s25
    %s28 = sadd.s32 1, %s19
    %s29 = scalar_select %p26, %s28, %s19
    %p30 = scmp.ge.s32.totalorder %s29, 2
    %s31 = scalar_select %p30, 0, %s29
    %s32 = ssub.s32 %s19, %s31
    %s33 = ssub.s32 %s20, %s27
    %s34 = sor.u32 %s32, %s33
    %p35 = scmp.eq.s32.totalorder %s34, 0
    %s37 = sadd.s32 %s36, 1
    %s38 = scalar_select %p35, %s36, %s37
    %p41 = pneg %p35
    %p42 = scmp.eq.s32.totalorder %s12, 3
    %p43 = por %p41, %p42
    %p44 = scmp.ne.s32.totalorder %s36, %s39
    %p45 = scmp.eq.s32.totalorder %s12, 0
    %p46 = por %p44, %p45
    %p47 = scmp.ne.s32.totalorder %s36, %s39
    %p48 = scmp.eq.s32.totalorder %s17, 3
    %p49 = por %p47, %p48
    %p50 = scmp.ne.s32.totalorder %s39, %s40
    %p51 = scmp.eq.s32.totalorder %s17, 0
    %p52 = por %p50, %p51
    %p53 = scmp.ne.s32.totalorder %s39, %s40
    %p54 = scmp.eq.s32.totalorder %s18, 3
    %p55 = por %p53, %p54
    %p57 = scmp.ne.s32.totalorder %s40, %s56
    %p58 = scmp.eq.s32.totalorder %s18, 0
    %p59 = por %p57, %p58
    %s60 = ssub.s32 %s19, %s31
    %p61 = scmp.eq.s32.totalorder %s60, 0
    %s63 = sadd.s32 %s62, 1
    %s64 = scalar_select %p61, %s62, %s63
    %p67 = pneg %p61
    %p68 = scmp.eq.s32.totalorder %s12, 3
    %p69 = por %p67, %p68
    %p70 = scmp.ne.s32.totalorder %s62, %s65
    %p71 = scmp.eq.s32.totalorder %s12, 0
    %p72 = por %p70, %p71
    %p73 = scmp.ne.s32.totalorder %s62, %s65
    %p74 = scmp.eq.s32.totalorder %s17, 3
    %p75 = por %p73, %p74
    %p76 = scmp.ne.s32.totalorder %s65, %s66
    %p77 = scmp.eq.s32.totalorder %s17, 0
    %p78 = por %p76, %p77
    %p79 = scmp.ne.s32.totalorder %s65, %s66
    %p80 = scmp.eq.s32.totalorder %s18, 3
    %p81 = por %p79, %p80
    %p83 = scmp.ne.s32.totalorder %s66, %s82
    %p84 = scmp.eq.s32.totalorder %s18, 0
    %p85 = por %p83, %p84
    %s87 = sadd.s32 %s86, 1
    %p90 = scmp.eq.s32.totalorder %s12, 3
    %p91 = scmp.ne.s32.totalorder %s86, %s88
    %p92 = scmp.eq.s32.totalorder %s12, 0
    %p93 = por %p91, %p92
    %p94 = scmp.ne.s32.totalorder %s86, %s88
    %p95 = scmp.eq.s32.totalorder %s17, 3
    %p96 = por %p94, %p95
    %p97 = scmp.ne.s32.totalorder %s88, %s89
    %p98 = scmp.eq.s32.totalorder %s17, 0
    %p99 = por %p97, %p98
    %p100 = scmp.ne.s32.totalorder %s88, %s89
    %p101 = scmp.eq.s32.totalorder %s18, 3
    %p102 = por %p100, %p101
    %p104 = scmp.ne.s32.totalorder %s89, %s103
    %p105 = scmp.eq.s32.totalorder %s18, 0
    %p106 = por %p104, %p105
    %s108 = sadd.s32 %s107, 1
    %p111 = scmp.eq.s32.totalorder %s12, 3
    %p112 = scmp.ne.s32.totalorder %s107, %s109
    %p113 = scmp.eq.s32.totalorder %s12, 0
    %p114 = por %p112, %p113
    %p115 = scmp.ne.s32.totalorder %s107, %s109
    %p116 = scmp.eq.s32.totalorder %s17, 3
    %p117 = por %p115, %p116
    %p118 = scmp.ne.s32.totalorder %s109, %s110
    %p119 = scmp.eq.s32.totalorder %s17, 0
    %p120 = por %p118, %p119
    %p121 = scmp.ne.s32.totalorder %s109, %s110
    %p122 = scmp.eq.s32.totalorder %s18, 3
    %p123 = por %p121, %p122
    %p125 = scmp.ne.s32.totalorder %s110, %s124
    %p126 = scmp.eq.s32.totalorder %s18, 0
    %p127 = por %p125, %p126
    %s129 = sadd.s32 %s128, 1
    %p132 = scmp.eq.s32.totalorder %s12, 3
    %p133 = scmp.ne.s32.totalorder %s128, %s130
    %p134 = scmp.eq.s32.totalorder %s12, 0
    %p135 = por %p133, %p134
    %p136 = scmp.ne.s32.totalorder %s128, %s130
    %p137 = scmp.eq.s32.totalorder %s17, 3
    %p138 = por %p136, %p137
    %p139 = scmp.ne.s32.totalorder %s130, %s131
    %p140 = scmp.eq.s32.totalorder %s17, 0
    %p141 = por %p139, %p140
    %p142 = scmp.ne.s32.totalorder %s130, %s131
    %p143 = scmp.eq.s32.totalorder %s18, 3
    %p144 = por %p142, %p143
    %p146 = scmp.ne.s32.totalorder %s131, %s145
    %p147 = scmp.eq.s32.totalorder %s18, 0
    %p148 = por %p146, %p147
    %s150 = sadd.s32 %s149, 1
    %p153 = scmp.eq.s32.totalorder %s12, 3
    %p154 = scmp.ne.s32.totalorder %s149, %s151
    %p155 = scmp.eq.s32.totalorder %s12, 0
    %p156 = por %p154, %p155
    %p157 = scmp.ne.s32.totalorder %s149, %s151
    %p158 = scmp.eq.s32.totalorder %s17, 3
    %p159 = por %p157, %p158
    %p160 = scmp.ne.s32.totalorder %s151, %s152
    %p161 = scmp.eq.s32.totalorder %s17, 0
    %p162 = por %p160, %p161
    %p163 = scmp.ne.s32.totalorder %s151, %s152
    %p164 = scmp.eq.s32.totalorder %s18, 3
    %p165 = por %p163, %p164
    %p167 = scmp.ne.s32.totalorder %s152, %s166
    %p168 = scmp.eq.s32.totalorder %s18, 0
    %p169 = por %p167, %p168
    %s170 = ssub.s32 %s19, %s31
    %s171 = ssub.s32 %s20, %s27
    %s172 = sor.u32 %s170, %s171
    %p173 = scmp.eq.s32.totalorder %s172, 0
    %s175 = sadd.s32 %s174, 1
    %s176 = scalar_select %p173, %s174, %s175
    %p179 = pneg %p173
    %p180 = scmp.eq.s32.totalorder %s12, 3
    %p181 = por %p179, %p180
    %p182 = scmp.ne.s32.totalorder %s174, %s177
    %p183 = scmp.eq.s32.totalorder %s12, 0
    %p184 = por %p182, %p183
    %p185 = scmp.ne.s32.totalorder %s174, %s177
    %p186 = scmp.eq.s32.totalorder %s17, 3
    %p187 = por %p185, %p186
    %p188 = scmp.ne.s32.totalorder %s177, %s178
    %p189 = scmp.eq.s32.totalorder %s17, 0
    %p190 = por %p188, %p189
    %p191 = scmp.ne.s32.totalorder %s177, %s178
    %p192 = scmp.eq.s32.totalorder %s18, 3
    %p193 = por %p191, %p192
    %p195 = scmp.ne.s32.totalorder %s178, %s194
    %p196 = scmp.eq.s32.totalorder %s18, 0
    %p197 = por %p195, %p196
    %p198 = scmp.le.s32.totalorder 1, %s12
    %p199 = scmp.lt.s32.totalorder %s12, 5
    %p200 = pnand %p198, %p199
    %p201 = pneg %p200
    // Predicated region
    $region9: #{glu_forward.2} parent=5 // pred_check
      _
    $region10: #{glu_forward.2} parent=5 // pred_check_branch
      %203 = sbr.rel (%p200) target = $region12
    $region11: #{glu_forward.2} parent=5 // pred_region
      %s204 = ssub.s32 %s12, 1
      // Predicated region
      $region13: #{glu_forward.2} parent=11 // pred_check
        %p205 = pneg %p99
      $region14: #{glu_forward.2} parent=11 // pred_check_branch
        %207 = sbr.rel (%p205) target = $region16
      $region15: #{glu_forward.2} parent=11 // pred_region
        _
      $region16: #{glu_forward.2} parent=11 // pred_fallthru
        _
      // Predicated region
      $region17: #{glu_forward.2} parent=11 // pred_check
        %p208 = pneg %p120
      $region18: #{glu_forward.2} parent=11 // pred_check_branch
        %210 = sbr.rel (%p208) target = $region20
      $region19: #{glu_forward.2} parent=11 // pred_region
        _
      $region20: #{glu_forward.2} parent=11 // pred_fallthru
        _
      // Predicated region
      $region21: #{glu_forward.2} parent=11 // pred_check
        %p211 = pneg %p141
      $region22: #{glu_forward.2} parent=11 // pred_check_branch
        %213 = sbr.rel (%p211) target = $region24
      $region23: #{glu_forward.2} parent=11 // pred_region
        _
      $region24: #{glu_forward.2} parent=11 // pred_fallthru
        _
      // Predicated region
      $region25: #{glu_forward.2} parent=11 // pred_check
        %p214 = pneg %p162
      $region26: #{glu_forward.2} parent=11 // pred_check_branch
        %216 = sbr.rel (%p214) target = $region28
      $region27: #{glu_forward.2} parent=11 // pred_region
        _
      $region28: #{glu_forward.2} parent=11 // pred_fallthru
        _
    $region12: #{glu_forward.2} parent=5 // pred_fallthru
      _
    %p217 = scmp.lt.s32.totalorder %s12, 4
    // Predicated region
    $region29: #{glu_forward.2} parent=5 // pred_check
      %p218 = pneg %p217
    $region30: #{glu_forward.2} parent=5 // pred_check_branch
      %220 = sbr.rel (%p218) target = $region32
    $region31: #{glu_forward.2} parent=5 // pred_region
      // Predicated region
      $region33: #{glu_forward.2} parent=31 // pred_check
        %p221 = pneg %p46
      $region34: #{glu_forward.2} parent=31 // pred_check_branch
        %223 = sbr.rel (%p221) target = $region36
      $region35: #{glu_forward.2} parent=31 // pred_region
        %s224 = smul.u32 2, %s20
        %p225 = scmp.lt.s32.totalorder %s19, 1
        %s226 = scalar_select %p225, %s19, 1
        %p227 = scmp.lt.s32.totalorder %s224, 3
        %s228 = scalar_select %p227, %s224, 3
        %s229 = smul.addr %s226, 4
        %s230 = sadd.s32 %s228, %s229
        %s231 = smul.addr %s230, 8
        %s232 = scalar_lea.vmem %s0, %s231
        %s233 = smul.u32 2, %s20
      $region36: #{glu_forward.2} parent=31 // pred_fallthru
        _
      // Predicated region
      $region37: #{glu_forward.2} parent=31 // pred_check
        %p234 = pneg %p72
      $region38: #{glu_forward.2} parent=31 // pred_check_branch
        %236 = sbr.rel (%p234) target = $region40
      $region39: #{glu_forward.2} parent=31 // pred_region
        %p237 = scmp.lt.s32.totalorder %s19, 1
        %s238 = scalar_select %p237, %s19, 1
        %s239 = smul.addr %s238, 2
        %s240 = smul.addr %s239, 2
        %s241 = scalar_lea.vmem %s1, %s240
      $region40: #{glu_forward.2} parent=31 // pred_fallthru
        _
    $region32: #{glu_forward.2} parent=5 // pred_fallthru
      _
    %p242 = scmp.le.s32.totalorder 1, %s12
    %p243 = scmp.lt.s32.totalorder %s12, 5
    %p244 = pnand %p242, %p243
    %p245 = pneg %p244
    // Predicated region
    $region41: #{glu_forward.2} parent=5 // pred_check
      _
    $region42: #{glu_forward.2} parent=5 // pred_check_branch
      %247 = sbr.rel (%p244) target = $region44
    $region43: #{glu_forward.2} parent=5 // pred_region
      %s248 = ssub.s32 %s12, 1
      %s249 = smul.u32 2, %s22
      %p250 = scmp.lt.s32.totalorder %s21, 1
      %s251 = scalar_select %p250, %s21, 1
      %p252 = scmp.lt.s32.totalorder %s249, 3
      %s253 = scalar_select %p252, %s249, 3
      %s254 = smul.addr %s251, 4
      %s255 = sadd.s32 %s253, %s254
      %s256 = smul.addr %s255, 8
      %s257 = scalar_lea.vmem %s0, %s256
      %p258 = pneg %p52
      %p259 = pneg %p49
      %p260 = scmp.lt.s32.totalorder %s21, 1
      %s261 = scalar_select %p260, %s21, 1
      %s262 = smul.addr %s261, 2
      %s263 = smul.addr %s262, 2
      %s264 = scalar_lea.vmem %s1, %s263
      %p265 = pneg %p78
      %p266 = pneg %p75
      %p267 = pneg %p99
      %p268 = pneg %p96
      %p269 = pneg %p120
      %p270 = pneg %p117
      %p271 = pneg %p141
      %p272 = pneg %p138
      %p273 = pneg %p162
      %p274 = pneg %p159
      %p275 = pneg %p190
      %p276 = pneg %p187
      %s277 = smul.u32 2, %s22
      %p278 = scmp.lt.s32.totalorder %s21, 1
      %s279 = scalar_select %p278, %s21, 1
      %p280 = scmp.lt.s32.totalorder %s277, 3
      %s281 = scalar_select %p280, %s277, 3
      %s282 = smul.addr %s279, 4
      %s283 = sadd.s32 %s281, %s282
      %s284 = smul.addr %s283, 8
      %s285 = scalar_lea.vmem %s6, %s284
      %s286 = smul.u32 2, %s22
      %p287 = scmp.lt.s32.totalorder %s21, 1
      %s288 = scalar_select %p287, %s21, 1
      %p289 = scmp.lt.s32.totalorder %s286, 3
      %s290 = scalar_select %p289, %s286, 3
      %s291 = smul.addr %s288, 4
      %s292 = sadd.s32 %s290, %s291
      %s293 = smul.addr %s292, 8
      %s294 = scalar_lea.vmem %s0, %s293
      %s295 = smul.u32 2, %s22
      %p296 = scmp.lt.s32.totalorder %s21, 1
      %s297 = scalar_select %p296, %s21, 1
      %s298 = smul.addr %s297, 2
      %s299 = smul.addr %s298, 2
      %s300 = scalar_lea.vmem %s1, %s299
      %s301 = smul.u32 2, %s22
      %p302 = scmp.lt.s32.totalorder %s21, 1
      %s303 = scalar_select %p302, %s21, 1
      %p304 = scmp.lt.s32.totalorder %s301, 3
      %s305 = scalar_select %p304, %s301, 3
      %s306 = smul.addr %s303, 4
      %s307 = sadd.s32 %s305, %s306
      %s308 = smul.addr %s307, 8
      %s309 = scalar_lea.vmem %s6, %s308
      %s310 = smul.u32 2, %s22
      %v311 = vld [vmem:[%s294] sm:$0xff]
      %v312 = vld [vmem:[%s294 + $0x8] sm:$0xff]
      %vm313 = vcmask 261120
      %314 = vst.msk [vmem:[#allocation2 + $0x10] sm:$0xff] %vm313, %v311
      %315 = vst.msk [vmem:[#allocation2 + $0x18] sm:$0xff] %vm313, %v312
      %s316 = smul.u32 %s22, 2
      %s317 = scalar_lea.vmem %s300, %s316
      %v318 = vld [vmem:[%s317] sm:$0x3]
      %vm319 = vcmask 253952
      %320 = vst.msk [vmem:[#allocation2 + $0xf] sm:$0x1] %vm319, %v318
      %vm321 = vcmask 254977
      %322 = vst.msk [vmem:[#allocation2 + $0x1f] sm:$0x2] %vm321, %v318
      %v323 = vld [vmem:[#allocation2 + $0xf] sm:$0xff]
      %v324 = vld [vmem:[#allocation2 + $0x17] sm:$0xff]
      %325 = vst.msk [vmem:[#allocation3] sm:$0xff] %vm313, %v323
      %326 = vst.msk [vmem:[#allocation3 + $0x8] sm:$0xff] %vm313, %v324
      %v327 = vld [vmem:[#allocation2 + $0x10] sm:$0xff]
      %v328 = vld [vmem:[#allocation2 + $0x18] sm:$0xff]
      %331 = vrot.lane.b32.xlu0 %v327, 32
      %v332 = vpop.permute.xlu0 %331
      %333 = vrot.lane.b32.xlu0 %v328, 32
      %v334 = vpop.permute.xlu0 %333
      %vm337 = vcmask 523520
      %338 = vst.msk [vmem:[#allocation3] sm:$0xff] %vm337, %v332
      %339 = vst.msk [vmem:[#allocation3 + $0x8] sm:$0xff] %vm337, %v334
      %v340 = vld [vmem:[#allocation2 + $0x11] sm:$0xff]
      %v341 = vld [vmem:[#allocation2 + $0x19] sm:$0xff]
      %344 = vrot.lane.b32.xlu0 %v340, 64
      %v345 = vpop.permute.xlu0 %344
      %346 = vrot.lane.b32.xlu0 %v341, 64
      %v347 = vpop.permute.xlu0 %346
      %vm350 = vcmask 785920
      %351 = vst.msk [vmem:[#allocation3] sm:$0xff] %vm350, %v345
      %352 = vst.msk [vmem:[#allocation3 + $0x8] sm:$0xff] %vm350, %v347
      %v353 = vld [vmem:[#allocation3] sm:$0xff]
      %v354 = vld [vmem:[#allocation3 + $0x8] sm:$0xff]
      %v355 = vld [vmem:[%s2] sm:$0xff]
      %v356 = vld [vmem:[%s2 + $0x8] sm:$0xff]
      %v357 = vld [vmem:[%s2 + $0x10] sm:$0xff]
      %v358 = vld [vmem:[%s2 + $0x18] sm:$0xff]
      %v359 = vld [vmem:[%s2 + $0x20] sm:$0xff]
      %v360 = vld [vmem:[%s2 + $0x28] sm:$0xff]
      %v361 = vld [vmem:[%s2 + $0x30] sm:$0xff]
      %v362 = vld [vmem:[%s2 + $0x38] sm:$0xff]
      %v363 = vld [vmem:[%s2 + $0x40] sm:$0xff]
      %v364 = vld [vmem:[%s2 + $0x48] sm:$0xff]
      %v365 = vld [vmem:[%s2 + $0x50] sm:$0xff]
      %v366 = vld [vmem:[%s2 + $0x58] sm:$0xff]
      %v367 = vld [vmem:[%s4] sm:$0x1]
      %v369 = vlaneseq
      %v370 = vshrl.u32 %v369, 7
      %v371 = vsub.s32 0, %v370
      %v372 = vrot.slane %v367, %v371
      %vm374 = vcmask 785408
      %v376 = vsel %vm374, %v353, 0
      %v379 = vsel %vm374, %v354, 0
      %381 = vmatprep.subr.mxu0 0.0
      %382 = vmatpush1.msra.mxu0 %v355
      %383 = vmatprep.subr.mxu0 0.0
      %384 = vmatpush1.msra.mxu0 %v356
      %385 = vmatprep.subr.mxu0 0.0
      %386 = vmatpush1.msra.mxu0 %v357
      %387 = vmatprep.subr.mxu0 0.0
      %388 = vmatpush1.msra.mxu0 %v358
      %389 = vmatprep.subr.mxu0 0.0
      %390 = vmatpush1.msra.mxu0 %v359
      %391 = vmatprep.subr.mxu0 0.0
      %392 = vmatpush1.msra.mxu0 %v360
      %393 = vmatprep.subr.mxu0 0.0
      %394 = vmatpush1.msra.mxu0 %v361
      %395 = vmatprep.subr.mxu0 0.0
      %396 = vmatpush1.msra.mxu0 %v362
      %397 = vmatprep.subr.mxu0 0.0
      %398 = vmatpush1.msra.mxu0 %v363
      %399 = vmatprep.subr.mxu0 0.0
      %400 = vmatpush1.msra.mxu0 %v364
      %401 = vmatprep.subr.mxu0 0.0
      %402 = vmatpush1.msra.mxu0 %v365
      %403 = vmatprep.subr.mxu0 0.0
      %404 = vmatpush1.msra.mxu0 %v366
      %405 = vmatprep.subr.mxu0 0.0
      %406 = vmatpush1.msra.mxu0 0.0
      %407 = vmatprep.subr.mxu0 0.0
      %408 = vmatpush1.msra.mxu0 0.0
      %409 = vmatprep.subr.mxu0 0.0
      %410 = vmatpush1.msra.mxu0 0.0
      %411 = vmatprep.subr.mxu0 0.0
      %412 = vmatpush1.msra.mxu0 0.0
      %413 = vmatprep.subr.mxu0 0.0
      %414 = vmatpush1.msra.mxu0 0.0
      %415 = vmatprep.subr.mxu0 0.0
      %416 = vmatpush1.msra.mxu0 0.0
      %417 = vmatprep.subr.mxu0 0.0
      %418 = vmatpush1.msra.mxu0 0.0
      %419 = vmatprep.subr.mxu0 0.0
      %420 = vmatpush1.msra.mxu0 0.0
      %421 = vmatprep.subr.mxu0 0.0
      %422 = vmatpush1.msra.mxu0 0.0
      %423 = vmatprep.subr.mxu0 0.0
      %424 = vmatpush1.msra.mxu0 0.0
      %425 = vmatprep.subr.mxu0 0.0
      %426 = vmatpush1.msra.mxu0 0.0
      %427 = vmatprep.subr.mxu0 0.0
      %428 = vmatpush1.msra.mxu0 0.0
      %429 = vmatprep.subr.mxu0 0.0
      %430 = vmatpush1.msra.mxu0 0.0
      %431 = vmatprep.subr.mxu0 0.0
      %432 = vmatpush1.msra.mxu0 0.0
      %433 = vmatprep.subr.mxu0 0.0
      %434 = vmatpush1.msra.mxu0 0.0
      %435 = vmatprep.subr.mxu0 0.0
      %436 = vmatpush1.msra.mxu0 0.0
      %437 = vmatprep.subr.mxu0 0.0
      %438 = vmatpush1.msra.mxu0 0.0
      %439 = vmatprep.subr.mxu0 0.0
      %440 = vmatpush1.msra.mxu0 0.0
      %441 = vmatprep.subr.mxu0 0.0
      %442 = vmatpush1.msra.mxu0 0.0
      %443 = vmatprep.subr.mxu0 0.0
      %444 = vmatpush1.msra.mxu0 0.0
      %445 = vmatprep.mubr.f32.mxu0 0.0
      %446 = vmatmul.mubr.f32.gmra.mrb[0].mxu0 %v376
      %v447 = vpop.f32.mrb[0].mxu0
      %v448 = vadd.f32 %v372, %v447
      %v449 = vpop.f32.mrb[0].mxu0
      %450 = vmatprep.mubr.f32.mxu0 0.0
      %451 = vmatmul.mubr.f32.gmra.mrb[0].mxu0 %v379
      %v452 = vpop.f32.mrb[0].mxu0
      %v453 = vadd.f32 %v372, %v452
      %v454 = vpop.f32.mrb[0].mxu0
      %455 = vdwg.mxu0
      %v456 = vld [vmem:[%s3] sm:$0xff]
      %v457 = vld [vmem:[%s3 + $0x8] sm:$0xff]
      %v458 = vld [vmem:[%s3 + $0x10] sm:$0xff]
      %v459 = vld [vmem:[%s3 + $0x18] sm:$0xff]
      %v460 = vld [vmem:[%s3 + $0x20] sm:$0xff]
      %v461 = vld [vmem:[%s3 + $0x28] sm:$0xff]
      %v462 = vld [vmem:[%s3 + $0x30] sm:$0xff]
      %v463 = vld [vmem:[%s3 + $0x38] sm:$0xff]
      %v464 = vld [vmem:[%s3 + $0x40] sm:$0xff]
      %v465 = vld [vmem:[%s3 + $0x48] sm:$0xff]
      %v466 = vld [vmem:[%s3 + $0x50] sm:$0xff]
      %v467 = vld [vmem:[%s3 + $0x58] sm:$0xff]
      %v468 = vld [vmem:[%s5] sm:$0x1]
      %v470 = vlaneseq
      %v471 = vshrl.u32 %v470, 7
      %v472 = vsub.s32 0, %v471
      %v473 = vrot.slane %v468, %v472
      %475 = vmatprep.subr.mxu0 0.0
      %476 = vmatpush1.msra.mxu0 %v456
      %477 = vmatprep.subr.mxu0 0.0
      %478 = vmatpush1.msra.mxu0 %v457
      %479 = vmatprep.subr.mxu0 0.0
      %480 = vmatpush1.msra.mxu0 %v458
      %481 = vmatprep.subr.mxu0 0.0
      %482 = vmatpush1.msra.mxu0 %v459
      %483 = vmatprep.subr.mxu0 0.0
      %484 = vmatpush1.msra.mxu0 %v460
      %485 = vmatprep.subr.mxu0 0.0
      %486 = vmatpush1.msra.mxu0 %v461
      %487 = vmatprep.subr.mxu0 0.0
      %488 = vmatpush1.msra.mxu0 %v462
      %489 = vmatprep.subr.mxu0 0.0
      %490 = vmatpush1.msra.mxu0 %v463
      %491 = vmatprep.subr.mxu0 0.0
      %492 = vmatpush1.msra.mxu0 %v464
      %493 = vmatprep.subr.mxu0 0.0
      %494 = vmatpush1.msra.mxu0 %v465
      %495 = vmatprep.subr.mxu0 0.0
      %496 = vmatpush1.msra.mxu0 %v466
      %497 = vmatprep.subr.mxu0 0.0
      %498 = vmatpush1.msra.mxu0 %v467
      %499 = vmatprep.subr.mxu0 0.0
      %500 = vmatpush1.msra.mxu0 0.0
      %501 = vmatprep.subr.mxu0 0.0
      %502 = vmatpush1.msra.mxu0 0.0
      %503 = vmatprep.subr.mxu0 0.0
      %504 = vmatpush1.msra.mxu0 0.0
      %505 = vmatprep.subr.mxu0 0.0
      %506 = vmatpush1.msra.mxu0 0.0
      %507 = vmatprep.subr.mxu0 0.0
      %508 = vmatpush1.msra.mxu0 0.0
      %509 = vmatprep.subr.mxu0 0.0
      %510 = vmatpush1.msra.mxu0 0.0
      %511 = vmatprep.subr.mxu0 0.0
      %512 = vmatpush1.msra.mxu0 0.0
      %513 = vmatprep.subr.mxu0 0.0
      %514 = vmatpush1.msra.mxu0 0.0
      %515 = vmatprep.subr.mxu0 0.0
      %516 = vmatpush1.msra.mxu0 0.0
      %517 = vmatprep.subr.mxu0 0.0
      %518 = vmatpush1.msra.mxu0 0.0
      %519 = vmatprep.subr.mxu0 0.0
      %520 = vmatpush1.msra.mxu0 0.0
      %521 = vmatprep.subr.mxu0 0.0
      %522 = vmatpush1.msra.mxu0 0.0
      %523 = vmatprep.subr.mxu0 0.0
      %524 = vmatpush1.msra.mxu0 0.0
      %525 = vmatprep.subr.mxu0 0.0
      %526 = vmatpush1.msra.mxu0 0.0
      %527 = vmatprep.subr.mxu0 0.0
      %528 = vmatpush1.msra.mxu0 0.0
      %529 = vmatprep.subr.mxu0 0.0
      %530 = vmatpush1.msra.mxu0 0.0
      %531 = vmatprep.subr.mxu0 0.0
      %532 = vmatpush1.msra.mxu0 0.0
      %533 = vmatprep.subr.mxu0 0.0
      %534 = vmatpush1.msra.mxu0 0.0
      %535 = vmatprep.subr.mxu0 0.0
      %536 = vmatpush1.msra.mxu0 0.0
      %537 = vmatprep.subr.mxu0 0.0
      %538 = vmatpush1.msra.mxu0 0.0
      %539 = vmatprep.mubr.f32.mxu0 0.0
      %540 = vmatmul.mubr.f32.gmra.mrb[0].mxu0 %v376
      %v541 = vpop.f32.mrb[0].mxu0
      %v542 = vadd.f32 %v473, %v541
      %v543 = vpop.f32.mrb[0].mxu0
      %544 = vmatprep.mubr.f32.mxu0 0.0
      %545 = vmatmul.mubr.f32.gmra.mrb[0].mxu0 %v379
      %v546 = vpop.f32.mrb[0].mxu0
      %v547 = vadd.f32 %v473, %v546
      %v548 = vpop.f32.mrb[0].mxu0
      %549 = vdwg.mxu0
      %v550 = vsub.f32 0.0, %v542
      %v551 = vsub.f32 0.0, %v547
      %v552 = vmul.f32 %v550, 1.442695
      %v553 = vpow.pop %v552
      %v554 = vmul.f32 %v551, 1.442695
      %v555 = vpow.pop %v554
      %v556 = vadd.f32 %v553, 1.0
      %v557 = vadd.f32 %v555, 1.0
      %v558 = vrcp.pop %v556
      %v559 = vrcp.pop %v557
      %v560 = vmul.f32 %v448, %v558
      %v561 = vmul.f32 %v453, %v559
      %562 = vst.msk [vmem:[%s309] sm:$0xff] %vm313, %v560
      %563 = vst.msk [vmem:[%s309 + $0x8] sm:$0xff] %vm313, %v561
      %s564 = smul.u32 2, %s22
      %p565 = scmp.lt.s32.totalorder %s21, 1
      %s566 = scalar_select %p565, %s21, 1
      %p567 = scmp.lt.s32.totalorder %s564, 3
      %s568 = scalar_select %p567, %s564, 3
      %s569 = smul.addr %s566, 4
      %s570 = sadd.s32 %s568, %s569
      %s571 = smul.addr %s570, 8
      %s572 = scalar_lea.vmem %s6, %s571
      // Predicated region
      $region45: #{glu_forward.2} parent=43 // pred_check
        %p573 = pneg %p187
      $region46: #{glu_forward.2} parent=43 // pred_check_branch
        %575 = sbr.rel (%p573) target = $region48
      $region47: #{glu_forward.2} parent=43 // pred_region
        %s576 = smul.u32 2, %s22
      $region48: #{glu_forward.2} parent=43 // pred_fallthru
        _
    $region44: #{glu_forward.2} parent=5 // pred_fallthru
      _
    %p577 = scmp.le.s32.totalorder 2, %s12
    // Predicated region
    $region49: #{glu_forward.2} parent=5 // pred_check
      %p578 = pneg %p577
    $region50: #{glu_forward.2} parent=5 // pred_check_branch
      %580 = sbr.rel (%p578) target = $region52
    $region51: #{glu_forward.2} parent=5 // pred_region
      %s581 = ssub.s32 %s12, 2
      // Predicated region
      $region53: #{glu_forward.2} parent=51 // pred_check
        %p582 = pneg %p193
      $region54: #{glu_forward.2} parent=51 // pred_check_branch
        %584 = sbr.rel (%p582) target = $region56
      $region55: #{glu_forward.2} parent=51 // pred_region
        %s585 = smul.u32 2, %s24
        %p586 = scmp.lt.s32.totalorder %s23, 1
        %s587 = scalar_select %p586, %s23, 1
        %p588 = scmp.lt.s32.totalorder %s585, 3
        %s589 = scalar_select %p588, %s585, 3
        %s590 = smul.addr %s587, 4
        %s591 = sadd.s32 %s589, %s590
        %s592 = smul.addr %s591, 8
        %s593 = scalar_lea.vmem %s6, %s592
      $region56: #{glu_forward.2} parent=51 // pred_fallthru
        _
    $region52: #{glu_forward.2} parent=5 // pred_fallthru
      _
  $region6: #{glu_forward.2} parent=0 // loop_footer
    %s16 = sadd.s32 1, %s12
  $region7: #{glu_forward.2} parent=0 // loop_footer_branch
    %11 = sbr.rel target = $region3
  $region8: #{glu_forward.2} parent=0 // loop_exit
    _

// kernel: glu_forward.3
$region0: #{glu_forward.3}
  #allocation0 [shape = 'u32[]', space=smem, size = 0x4, offset = 0x4, fixed_abs, tag = 'smem constant byte address 0x4 - core index']
  #allocation1 [shape = 'u32[144,128]{1,0:T(1,128)}', space=vmem, size = 0x12000, scoped, tag = 'internal scratch']
  #allocation2 [shape = 'f32[33,32]{1,0:T(8,128)}', space=vmem, size = 0x5000, scoped, tag = 'scratch operand']
  #allocation3 [shape = 'f32[16,96]{1,0:T(8,128)}', space=vmem, size = 0x2000, scoped, tag = 'scratch operand']
  %s0 = inlined_call_operand.vmem [shape: f32[2,32,32], index: 0, kind: input, shape index: {}]
  %s1 = inlined_call_operand.vmem [shape: f32[2,2,2,32], index: 1, kind: input, shape index: {}]
  %s2 = inlined_call_operand.vmem [shape: f32[96,32], index: 2, kind: input, shape index: {}]
  %s3 = inlined_call_operand.vmem [shape: f32[96,32], index: 3, kind: input, shape index: {}]
  %s4 = inlined_call_operand.vmem [shape: f32[1,32], index: 4, kind: input, shape index: {}]
  %s5 = inlined_call_operand.vmem [shape: f32[1,32], index: 5, kind: input, shape index: {}]
  %s6 = inlined_call_operand.hbm [shape: f32[2,32,32], index: 6, kind: output, shape index: {}]
  %s7 = sld [smem:[#allocation0]]
  $region57: #{glu_forward.3} parent=0
    _
  %s9 = ssub.s32 1, %s7
  %s10 = scalar_select 0, %s9, %s7
  $region1: #{glu_forward.3} parent=0
    #allocation4 [shape = 'u8[16384]{0}', space=vmem, size = 0x4000, scoped, tag = 'output window, operand 0']
    #allocation5 [shape = 's32[2]{0}', space=sflag, size = 0x8, scoped, tag = 'scoped memory for glu_forward.3']
    %11 = vsyncpa [#allocation5], 0
    %s12 = scalar_lea.sflag [#allocation5], 1
    %13 = vsyncpa %s12, 0
    loop: start=0, step=1, limit=6
    $region2: #{glu_forward.3} parent=1 // loop_pre_header
      _
    $region3: #{glu_forward.3} parent=1 // loop_header
      %s15 = sphi 0, %s19
      %p16 = scmp.ge.s32.totalorder %s15, 6
      %s22 = sphi 0, %s34
      %s23 = sphi 0, %s30
      %s24 = sphi 0, %s22
      %s25 = sphi 0, %s23
      %s26 = sphi 0, %s24
      %s27 = sphi 0, %s25
      %s39 = sphi 0, %s41
      %s42 = sphi 0, %s39
      %s43 = sphi 0, %s42
      %s59 = sphi 0, %s43
      %s65 = sphi 0, %s67
      %s68 = sphi 0, %s65
      %s69 = sphi 0, %s68
      %s85 = sphi 0, %s69
      %s89 = sphi 0, %s89
      %s91 = sphi 0, %s89
      %s92 = sphi 0, %s91
      %s106 = sphi 0, %s92
      %s110 = sphi 0, %s110
      %s112 = sphi 0, %s110
      %s113 = sphi 0, %s112
      %s127 = sphi 0, %s113
      %s131 = sphi 0, %s131
      %s133 = sphi 0, %s131
      %s134 = sphi 0, %s133
      %s148 = sphi 0, %s134
      %s152 = sphi 0, %s152
      %s154 = sphi 0, %s152
      %s155 = sphi 0, %s154
      %s169 = sphi 0, %s155
      %s177 = sphi 0, %s179
      %s180 = sphi 0, %s177
      %s181 = sphi 0, %s180
      %s197 = sphi 0, %s181
    $region4: #{glu_forward.3} parent=1 // loop_header_branch
      %18 = sbr.rel (%p16) target = $region8
    $region5: #{glu_forward.3} parent=1 // loop_body
      %s20 = ssub.s32 %s15, 1
      %s21 = ssub.s32 %s15, 2
      %s28 = sadd.s32 1, %s23
      %p29 = scmp.ge.s32.totalorder %s28, 2
      %s30 = scalar_select %p29, 0, %s28
      %s31 = sadd.s32 1, %s22
      %s32 = scalar_select %p29, %s31, %s22
      %p33 = scmp.ge.s32.totalorder %s32, 2
      %s34 = scalar_select %p33, 0, %s32
      %s35 = ssub.s32 %s22, %s34
      %s36 = ssub.s32 %s23, %s30
      %s37 = sor.u32 %s35, %s36
      %p38 = scmp.eq.s32.totalorder %s37, 0
      %s40 = sadd.s32 %s39, 1
      %s41 = scalar_select %p38, %s39, %s40
      %p44 = pneg %p38
      %p45 = scmp.eq.s32.totalorder %s15, 3
      %p46 = por %p44, %p45
      %p47 = scmp.ne.s32.totalorder %s39, %s42
      %p48 = scmp.eq.s32.totalorder %s15, 0
      %p49 = por %p47, %p48
      %p50 = scmp.ne.s32.totalorder %s39, %s42
      %p51 = scmp.eq.s32.totalorder %s20, 3
      %p52 = por %p50, %p51
      %p53 = scmp.ne.s32.totalorder %s42, %s43
      %p54 = scmp.eq.s32.totalorder %s20, 0
      %p55 = por %p53, %p54
      %p56 = scmp.ne.s32.totalorder %s42, %s43
      %p57 = scmp.eq.s32.totalorder %s21, 3
      %p58 = por %p56, %p57
      %p60 = scmp.ne.s32.totalorder %s43, %s59
      %p61 = scmp.eq.s32.totalorder %s21, 0
      %p62 = por %p60, %p61
      %s63 = ssub.s32 %s22, %s34
      %p64 = scmp.eq.s32.totalorder %s63, 0
      %s66 = sadd.s32 %s65, 1
      %s67 = scalar_select %p64, %s65, %s66
      %p70 = pneg %p64
      %p71 = scmp.eq.s32.totalorder %s15, 3
      %p72 = por %p70, %p71
      %p73 = scmp.ne.s32.totalorder %s65, %s68
      %p74 = scmp.eq.s32.totalorder %s15, 0
      %p75 = por %p73, %p74
      %p76 = scmp.ne.s32.totalorder %s65, %s68
      %p77 = scmp.eq.s32.totalorder %s20, 3
      %p78 = por %p76, %p77
      %p79 = scmp.ne.s32.totalorder %s68, %s69
      %p80 = scmp.eq.s32.totalorder %s20, 0
      %p81 = por %p79, %p80
      %p82 = scmp.ne.s32.totalorder %s68, %s69
      %p83 = scmp.eq.s32.totalorder %s21, 3
      %p84 = por %p82, %p83
      %p86 = scmp.ne.s32.totalorder %s69, %s85
      %p87 = scmp.eq.s32.totalorder %s21, 0
      %p88 = por %p86, %p87
      %s90 = sadd.s32 %s89, 1
      %p93 = scmp.eq.s32.totalorder %s15, 3
      %p94 = scmp.ne.s32.totalorder %s89, %s91
      %p95 = scmp.eq.s32.totalorder %s15, 0
      %p96 = por %p94, %p95
      %p97 = scmp.ne.s32.totalorder %s89, %s91
      %p98 = scmp.eq.s32.totalorder %s20, 3
      %p99 = por %p97, %p98
      %p100 = scmp.ne.s32.totalorder %s91, %s92
      %p101 = scmp.eq.s32.totalorder %s20, 0
      %p102 = por %p100, %p101
      %p103 = scmp.ne.s32.totalorder %s91, %s92
      %p104 = scmp.eq.s32.totalorder %s21, 3
      %p105 = por %p103, %p104
      %p107 = scmp.ne.s32.totalorder %s92, %s106
      %p108 = scmp.eq.s32.totalorder %s21, 0
      %p109 = por %p107, %p108
      %s111 = sadd.s32 %s110, 1
      %p114 = scmp.eq.s32.totalorder %s15, 3
      %p115 = scmp.ne.s32.totalorder %s110, %s112
      %p116 = scmp.eq.s32.totalorder %s15, 0
      %p117 = por %p115, %p116
      %p118 = scmp.ne.s32.totalorder %s110, %s112
      %p119 = scmp.eq.s32.totalorder %s20, 3
      %p120 = por %p118, %p119
      %p121 = scmp.ne.s32.totalorder %s112, %s113
      %p122 = scmp.eq.s32.totalorder %s20, 0
      %p123 = por %p121, %p122
      %p124 = scmp.ne.s32.totalorder %s112, %s113
      %p125 = scmp.eq.s32.totalorder %s21, 3
      %p126 = por %p124, %p125
      %p128 = scmp.ne.s32.totalorder %s113, %s127
      %p129 = scmp.eq.s32.totalorder %s21, 0
      %p130 = por %p128, %p129
      %s132 = sadd.s32 %s131, 1
      %p135 = scmp.eq.s32.totalorder %s15, 3
      %p136 = scmp.ne.s32.totalorder %s131, %s133
      %p137 = scmp.eq.s32.totalorder %s15, 0
      %p138 = por %p136, %p137
      %p139 = scmp.ne.s32.totalorder %s131, %s133
      %p140 = scmp.eq.s32.totalorder %s20, 3
      %p141 = por %p139, %p140
      %p142 = scmp.ne.s32.totalorder %s133, %s134
      %p143 = scmp.eq.s32.totalorder %s20, 0
      %p144 = por %p142, %p143
      %p145 = scmp.ne.s32.totalorder %s133, %s134
      %p146 = scmp.eq.s32.totalorder %s21, 3
      %p147 = por %p145, %p146
      %p149 = scmp.ne.s32.totalorder %s134, %s148
      %p150 = scmp.eq.s32.totalorder %s21, 0
      %p151 = por %p149, %p150
      %s153 = sadd.s32 %s152, 1
      %p156 = scmp.eq.s32.totalorder %s15, 3
      %p157 = scmp.ne.s32.totalorder %s152, %s154
      %p158 = scmp.eq.s32.totalorder %s15, 0
      %p159 = por %p157, %p158
      %p160 = scmp.ne.s32.totalorder %s152, %s154
      %p161 = scmp.eq.s32.totalorder %s20, 3
      %p162 = por %p160, %p161
      %p163 = scmp.ne.s32.totalorder %s154, %s155
      %p164 = scmp.eq.s32.totalorder %s20, 0
      %p165 = por %p163, %p164
      %p166 = scmp.ne.s32.totalorder %s154, %s155
      %p167 = scmp.eq.s32.totalorder %s21, 3
      %p168 = por %p166, %p167
      %p170 = scmp.ne.s32.totalorder %s155, %s169
      %p171 = scmp.eq.s32.totalorder %s21, 0
      %p172 = por %p170, %p171
      %s173 = ssub.s32 %s22, %s34
      %s174 = ssub.s32 %s23, %s30
      %s175 = sor.u32 %s173, %s174
      %p176 = scmp.eq.s32.totalorder %s175, 0
      %s178 = sadd.s32 %s177, 1
      %s179 = scalar_select %p176, %s177, %s178
      %p182 = pneg %p176
      %p183 = scmp.eq.s32.totalorder %s15, 3
      %p184 = por %p182, %p183
      %p185 = scmp.ne.s32.totalorder %s177, %s180
      %p186 = scmp.eq.s32.totalorder %s15, 0
      %p187 = por %p185, %p186
      %p188 = scmp.ne.s32.totalorder %s177, %s180
      %p189 = scmp.eq.s32.totalorder %s20, 3
      %p190 = por %p188, %p189
      %p191 = scmp.ne.s32.totalorder %s180, %s181
      %p192 = scmp.eq.s32.totalorder %s20, 0
      %p193 = por %p191, %p192
      %p194 = scmp.ne.s32.totalorder %s180, %s181
      %p195 = scmp.eq.s32.totalorder %s21, 3
      %p196 = por %p194, %p195
      %p198 = scmp.ne.s32.totalorder %s181, %s197
      %p199 = scmp.eq.s32.totalorder %s21, 0
      %p200 = por %p198, %p199
      %p201 = scmp.le.s32.totalorder 1, %s15
      %p202 = scmp.lt.s32.totalorder %s15, 5
      %p203 = pnand %p201, %p202
      %p204 = pneg %p203
      // Predicated region
      $region9: #{glu_forward.3} parent=5 // pred_check
        _
      $region10: #{glu_forward.3} parent=5 // pred_check_branch
        %206 = sbr.rel (%p203) target = $region12
      $region11: #{glu_forward.3} parent=5 // pred_region
        %s207 = ssub.s32 %s15, 1
        // Predicated region
        $region13: #{glu_forward.3} parent=11 // pred_check
          %p208 = pneg %p102
        $region14: #{glu_forward.3} parent=11 // pred_check_branch
          %210 = sbr.rel (%p208) target = $region16
        $region15: #{glu_forward.3} parent=11 // pred_region
          _
        $region16: #{glu_forward.3} parent=11 // pred_fallthru
          _
        // Predicated region
        $region17: #{glu_forward.3} parent=11 // pred_check
          %p211 = pneg %p123
        $region18: #{glu_forward.3} parent=11 // pred_check_branch
          %213 = sbr.rel (%p211) target = $region20
        $region19: #{glu_forward.3} parent=11 // pred_region
          _
        $region20: #{glu_forward.3} parent=11 // pred_fallthru
          _
        // Predicated region
        $region21: #{glu_forward.3} parent=11 // pred_check
          %p214 = pneg %p144
        $region22: #{glu_forward.3} parent=11 // pred_check_branch
          %216 = sbr.rel (%p214) target = $region24
        $region23: #{glu_forward.3} parent=11 // pred_region
          _
        $region24: #{glu_forward.3} parent=11 // pred_fallthru
          _
        // Predicated region
        $region25: #{glu_forward.3} parent=11 // pred_check
          %p217 = pneg %p165
        $region26: #{glu_forward.3} parent=11 // pred_check_branch
          %219 = sbr.rel (%p217) target = $region28
        $region27: #{glu_forward.3} parent=11 // pred_region
          _
        $region28: #{glu_forward.3} parent=11 // pred_fallthru
          _
      $region12: #{glu_forward.3} parent=5 // pred_fallthru
        _
      %p220 = scmp.lt.s32.totalorder %s15, 4
      // Predicated region
      $region29: #{glu_forward.3} parent=5 // pred_check
        %p221 = pneg %p220
      $region30: #{glu_forward.3} parent=5 // pred_check_branch
        %223 = sbr.rel (%p221) target = $region32
      $region31: #{glu_forward.3} parent=5 // pred_region
        // Predicated region
        $region33: #{glu_forward.3} parent=31 // pred_check
          %p224 = pneg %p49
        $region34: #{glu_forward.3} parent=31 // pred_check_branch
          %226 = sbr.rel (%p224) target = $region36
        $region35: #{glu_forward.3} parent=31 // pred_region
          %s227 = smul.u32 2, %s23
          %p228 = scmp.lt.s32.totalorder %s22, 1
          %s229 = scalar_select %p228, %s22, 1
          %p230 = scmp.lt.s32.totalorder %s227, 3
          %s231 = scalar_select %p230, %s227, 3
          %s232 = smul.addr %s229, 4
          %s233 = sadd.s32 %s231, %s232
          %s234 = smul.addr %s233, 8
          %s235 = scalar_lea.vmem %s0, %s234
          %s236 = smul.u32 2, %s23
        $region36: #{glu_forward.3} parent=31 // pred_fallthru
          _
        // Predicated region
        $region37: #{glu_forward.3} parent=31 // pred_check
          %p237 = pneg %p75
        $region38: #{glu_forward.3} parent=31 // pred_check_branch
          %239 = sbr.rel (%p237) target = $region40
        $region39: #{glu_forward.3} parent=31 // pred_region
          %p240 = scmp.lt.s32.totalorder %s22, 1
          %s241 = scalar_select %p240, %s22, 1
          %s242 = smul.addr %s241, 2
          %s243 = smul.addr %s242, 2
          %s244 = scalar_lea.vmem %s1, %s243
        $region40: #{glu_forward.3} parent=31 // pred_fallthru
          _
      $region32: #{glu_forward.3} parent=5 // pred_fallthru
        _
      %p245 = scmp.le.s32.totalorder 1, %s15
      %p246 = scmp.lt.s32.totalorder %s15, 5
      %p247 = pnand %p245, %p246
      %p248 = pneg %p247
      // Predicated region
      $region41: #{glu_forward.3} parent=5 // pred_check
        _
      $region42: #{glu_forward.3} parent=5 // pred_check_branch
        %250 = sbr.rel (%p247) target = $region44
      $region43: #{glu_forward.3} parent=5 // pred_region
        %s251 = ssub.s32 %s15, 1
        %s252 = smul.u32 2, %s25
        %p253 = scmp.lt.s32.totalorder %s24, 1
        %s254 = scalar_select %p253, %s24, 1
        %p255 = scmp.lt.s32.totalorder %s252, 3
        %s256 = scalar_select %p255, %s252, 3
        %s257 = smul.addr %s254, 4
        %s258 = sadd.s32 %s256, %s257
        %s259 = smul.addr %s258, 8
        %s260 = scalar_lea.vmem %s0, %s259
        %p261 = pneg %p55
        %p262 = pneg %p52
        %p263 = scmp.lt.s32.totalorder %s24, 1
        %s264 = scalar_select %p263, %s24, 1
        %s265 = smul.addr %s264, 2
        %s266 = smul.addr %s265, 2
        %s267 = scalar_lea.vmem %s1, %s266
        %p268 = pneg %p81
        %p269 = pneg %p78
        %p270 = pneg %p102
        %p271 = pneg %p99
        %p272 = pneg %p123
        %p273 = pneg %p120
        %p274 = pneg %p144
        %p275 = pneg %p141
        %p276 = pneg %p165
        %p277 = pneg %p162
        %p278 = pneg %p193
        %p279 = pneg %p190
        %s280 = sand.u32 %s180, 1
        %s281 = scalar_lea.sflag [#allocation5], %s280
        %s282 = sand.u32 %s180, 1
        %s283 = smul.addr %s282, 16
        %s284 = scalar_lea.vmem [#allocation4], %s283
        %s285 = smul.u32 2, %s25
        %p286 = scmp.lt.s32.totalorder %s24, 1
        %s287 = scalar_select %p286, %s24, 1
        %p288 = scmp.lt.s32.totalorder %s285, 3
        %s289 = scalar_select %p288, %s285, 3
        %s290 = smul.addr %s287, 4
        %s291 = sadd.s32 %s289, %s290
        %s292 = smul.addr %s291, 8
        %s293 = scalar_lea.vmem %s0, %s292
        %s294 = smul.u32 2, %s25
        %p295 = scmp.lt.s32.totalorder %s24, 1
        %s296 = scalar_select %p295, %s24, 1
        %s297 = smul.addr %s296, 2
        %s298 = smul.addr %s297, 2
        %s299 = scalar_lea.vmem %s1, %s298
        %s300 = smul.u32 2, %s25
        %v301 = vld [vmem:[%s293] sm:$0xff]
        %v302 = vld [vmem:[%s293 + $0x8] sm:$0xff]
        %vm303 = vcmask 261120
        %304 = vst.msk [vmem:[#allocation2 + $0x10] sm:$0xff] %vm303, %v301
        %305 = vst.msk [vmem:[#allocation2 + $0x18] sm:$0xff] %vm303, %v302
        %s306 = smul.u32 %s25, 2
        %s307 = scalar_lea.vmem %s299, %s306
        %v308 = vld [vmem:[%s307] sm:$0x3]
        %vm309 = vcmask 253952
        %310 = vst.msk [vmem:[#allocation2 + $0xf] sm:$0x1] %vm309, %v308
        %vm311 = vcmask 254977
        %312 = vst.msk [vmem:[#allocation2 + $0x1f] sm:$0x2] %vm311, %v308
        %v313 = vld [vmem:[#allocation2 + $0xf] sm:$0xff]
        %v314 = vld [vmem:[#allocation2 + $0x17] sm:$0xff]
        %315 = vst.msk [vmem:[#allocation3] sm:$0xff] %vm303, %v313
        %316 = vst.msk [vmem:[#allocation3 + $0x8] sm:$0xff] %vm303, %v314
        %v317 = vld [vmem:[#allocation2 + $0x10] sm:$0xff]
        %v318 = vld [vmem:[#allocation2 + $0x18] sm:$0xff]
        %321 = vrot.lane.b32.xlu0 %v317, 32
        %v322 = vpop.permute.xlu0 %321
        %323 = vrot.lane.b32.xlu0 %v318, 32
        %v324 = vpop.permute.xlu0 %323
        %vm327 = vcmask 523520
        %328 = vst.msk [vmem:[#allocation3] sm:$0xff] %vm327, %v322
        %329 = vst.msk [vmem:[#allocation3 + $0x8] sm:$0xff] %vm327, %v324
        %v330 = vld [vmem:[#allocation2 + $0x11] sm:$0xff]
        %v331 = vld [vmem:[#allocation2 + $0x19] sm:$0xff]
        %334 = vrot.lane.b32.xlu0 %v330, 64
        %v335 = vpop.permute.xlu0 %334
        %336 = vrot.lane.b32.xlu0 %v331, 64
        %v337 = vpop.permute.xlu0 %336
        %vm340 = vcmask 785920
        %341 = vst.msk [vmem:[#allocation3] sm:$0xff] %vm340, %v335
        %342 = vst.msk [vmem:[#allocation3 + $0x8] sm:$0xff] %vm340, %v337
        %v343 = vld [vmem:[#allocation3] sm:$0xff]
        %v344 = vld [vmem:[#allocation3 + $0x8] sm:$0xff]
        %v345 = vld [vmem:[%s2] sm:$0xff]
        %v346 = vld [vmem:[%s2 + $0x8] sm:$0xff]
        %v347 = vld [vmem:[%s2 + $0x10] sm:$0xff]
        %v348 = vld [vmem:[%s2 + $0x18] sm:$0xff]
        %v349 = vld [vmem:[%s2 + $0x20] sm:$0xff]
        %v350 = vld [vmem:[%s2 + $0x28] sm:$0xff]
        %v351 = vld [vmem:[%s2 + $0x30] sm:$0xff]
        %v352 = vld [vmem:[%s2 + $0x38] sm:$0xff]
        %v353 = vld [vmem:[%s2 + $0x40] sm:$0xff]
        %v354 = vld [vmem:[%s2 + $0x48] sm:$0xff]
        %v355 = vld [vmem:[%s2 + $0x50] sm:$0xff]
        %v356 = vld [vmem:[%s2 + $0x58] sm:$0xff]
        %v357 = vld [vmem:[%s4] sm:$0x1]
        %v359 = vlaneseq
        %v360 = vshrl.u32 %v359, 7
        %v361 = vsub.s32 0, %v360
        %v362 = vrot.slane %v357, %v361
        %vm364 = vcmask 785408
        %v366 = vsel %vm364, %v343, 0
        %v369 = vsel %vm364, %v344, 0
        %371 = vmatprep.subr.mxu0 0.0
        %372 = vmatpush1.msra.mxu0 %v345
        %373 = vmatprep.subr.mxu0 0.0
        %374 = vmatpush1.msra.mxu0 %v346
        %375 = vmatprep.subr.mxu0 0.0
        %376 = vmatpush1.msra.mxu0 %v347
        %377 = vmatprep.subr.mxu0 0.0
        %378 = vmatpush1.msra.mxu0 %v348
        %379 = vmatprep.subr.mxu0 0.0
        %380 = vmatpush1.msra.mxu0 %v349
        %381 = vmatprep.subr.mxu0 0.0
        %382 = vmatpush1.msra.mxu0 %v350
        %383 = vmatprep.subr.mxu0 0.0
        %384 = vmatpush1.msra.mxu0 %v351
        %385 = vmatprep.subr.mxu0 0.0
        %386 = vmatpush1.msra.mxu0 %v352
        %387 = vmatprep.subr.mxu0 0.0
        %388 = vmatpush1.msra.mxu0 %v353
        %389 = vmatprep.subr.mxu0 0.0
        %390 = vmatpush1.msra.mxu0 %v354
        %391 = vmatprep.subr.mxu0 0.0
        %392 = vmatpush1.msra.mxu0 %v355
        %393 = vmatprep.subr.mxu0 0.0
        %394 = vmatpush1.msra.mxu0 %v356
        %395 = vmatprep.subr.mxu0 0.0
        %396 = vmatpush1.msra.mxu0 0.0
        %397 = vmatprep.subr.mxu0 0.0
        %398 = vmatpush1.msra.mxu0 0.0
        %399 = vmatprep.subr.mxu0 0.0
        %400 = vmatpush1.msra.mxu0 0.0
        %401 = vmatprep.subr.mxu0 0.0
        %402 = vmatpush1.msra.mxu0 0.0
        %403 = vmatprep.subr.mxu0 0.0
        %404 = vmatpush1.msra.mxu0 0.0
        %405 = vmatprep.subr.mxu0 0.0
        %406 = vmatpush1.msra.mxu0 0.0
        %407 = vmatprep.subr.mxu0 0.0
        %408 = vmatpush1.msra.mxu0 0.0
        %409 = vmatprep.subr.mxu0 0.0
        %410 = vmatpush1.msra.mxu0 0.0
        %411 = vmatprep.subr.mxu0 0.0
        %412 = vmatpush1.msra.mxu0 0.0
        %413 = vmatprep.subr.mxu0 0.0
        %414 = vmatpush1.msra.mxu0 0.0
        %415 = vmatprep.subr.mxu0 0.0
        %416 = vmatpush1.msra.mxu0 0.0
        %417 = vmatprep.subr.mxu0 0.0
        %418 = vmatpush1.msra.mxu0 0.0
        %419 = vmatprep.subr.mxu0 0.0
        %420 = vmatpush1.msra.mxu0 0.0
        %421 = vmatprep.subr.mxu0 0.0
        %422 = vmatpush1.msra.mxu0 0.0
        %423 = vmatprep.subr.mxu0 0.0
        %424 = vmatpush1.msra.mxu0 0.0
        %425 = vmatprep.subr.mxu0 0.0
        %426 = vmatpush1.msra.mxu0 0.0
        %427 = vmatprep.subr.mxu0 0.0
        %428 = vmatpush1.msra.mxu0 0.0
        %429 = vmatprep.subr.mxu0 0.0
        %430 = vmatpush1.msra.mxu0 0.0
        %431 = vmatprep.subr.mxu0 0.0
        %432 = vmatpush1.msra.mxu0 0.0
        %433 = vmatprep.subr.mxu0 0.0
        %434 = vmatpush1.msra.mxu0 0.0
        %435 = vmatprep.mubr.f32.mxu0 0.0
        %436 = vmatmul.mubr.f32.gmra.mrb[0].mxu0 %v366
        %v437 = vpop.f32.mrb[0].mxu0
        %v438 = vadd.f32 %v362, %v437
        %v439 = vpop.f32.mrb[0].mxu0
        %440 = vmatprep.mubr.f32.mxu0 0.0
        %441 = vmatmul.mubr.f32.gmra.mrb[0].mxu0 %v369
        %v442 = vpop.f32.mrb[0].mxu0
        %v443 = vadd.f32 %v362, %v442
        %v444 = vpop.f32.mrb[0].mxu0
        %445 = vdwg.mxu0
        %v446 = vld [vmem:[%s3] sm:$0xff]
        %v447 = vld [vmem:[%s3 + $0x8] sm:$0xff]
        %v448 = vld [vmem:[%s3 + $0x10] sm:$0xff]
        %v449 = vld [vmem:[%s3 + $0x18] sm:$0xff]
        %v450 = vld [vmem:[%s3 + $0x20] sm:$0xff]
        %v451 = vld [vmem:[%s3 + $0x28] sm:$0xff]
        %v452 = vld [vmem:[%s3 + $0x30] sm:$0xff]
        %v453 = vld [vmem:[%s3 + $0x38] sm:$0xff]
        %v454 = vld [vmem:[%s3 + $0x40] sm:$0xff]
        %v455 = vld [vmem:[%s3 + $0x48] sm:$0xff]
        %v456 = vld [vmem:[%s3 + $0x50] sm:$0xff]
        %v457 = vld [vmem:[%s3 + $0x58] sm:$0xff]
        %v458 = vld [vmem:[%s5] sm:$0x1]
        %v460 = vlaneseq
        %v461 = vshrl.u32 %v460, 7
        %v462 = vsub.s32 0, %v461
        %v463 = vrot.slane %v458, %v462
        %465 = vmatprep.subr.mxu0 0.0
        %466 = vmatpush1.msra.mxu0 %v446
        %467 = vmatprep.subr.mxu0 0.0
        %468 = vmatpush1.msra.mxu0 %v447
        %469 = vmatprep.subr.mxu0 0.0
        %470 = vmatpush1.msra.mxu0 %v448
        %471 = vmatprep.subr.mxu0 0.0
        %472 = vmatpush1.msra.mxu0 %v449
        %473 = vmatprep.subr.mxu0 0.0
        %474 = vmatpush1.msra.mxu0 %v450
        %475 = vmatprep.subr.mxu0 0.0
        %476 = vmatpush1.msra.mxu0 %v451
        %477 = vmatprep.subr.mxu0 0.0
        %478 = vmatpush1.msra.mxu0 %v452
        %479 = vmatprep.subr.mxu0 0.0
        %480 = vmatpush1.msra.mxu0 %v453
        %481 = vmatprep.subr.mxu0 0.0
        %482 = vmatpush1.msra.mxu0 %v454
        %483 = vmatprep.subr.mxu0 0.0
        %484 = vmatpush1.msra.mxu0 %v455
        %485 = vmatprep.subr.mxu0 0.0
        %486 = vmatpush1.msra.mxu0 %v456
        %487 = vmatprep.subr.mxu0 0.0
        %488 = vmatpush1.msra.mxu0 %v457
        %489 = vmatprep.subr.mxu0 0.0
        %490 = vmatpush1.msra.mxu0 0.0
        %491 = vmatprep.subr.mxu0 0.0
        %492 = vmatpush1.msra.mxu0 0.0
        %493 = vmatprep.subr.mxu0 0.0
        %494 = vmatpush1.msra.mxu0 0.0
        %495 = vmatprep.subr.mxu0 0.0
        %496 = vmatpush1.msra.mxu0 0.0
        %497 = vmatprep.subr.mxu0 0.0
        %498 = vmatpush1.msra.mxu0 0.0
        %499 = vmatprep.subr.mxu0 0.0
        %500 = vmatpush1.msra.mxu0 0.0
        %501 = vmatprep.subr.mxu0 0.0
        %502 = vmatpush1.msra.mxu0 0.0
        %503 = vmatprep.subr.mxu0 0.0
        %504 = vmatpush1.msra.mxu0 0.0
        %505 = vmatprep.subr.mxu0 0.0
        %506 = vmatpush1.msra.mxu0 0.0
        %507 = vmatprep.subr.mxu0 0.0
        %508 = vmatpush1.msra.mxu0 0.0
        %509 = vmatprep.subr.mxu0 0.0
        %510 = vmatpush1.msra.mxu0 0.0
        %511 = vmatprep.subr.mxu0 0.0
        %512 = vmatpush1.msra.mxu0 0.0
        %513 = vmatprep.subr.mxu0 0.0
        %514 = vmatpush1.msra.mxu0 0.0
        %515 = vmatprep.subr.mxu0 0.0
        %516 = vmatpush1.msra.mxu0 0.0
        %517 = vmatprep.subr.mxu0 0.0
        %518 = vmatpush1.msra.mxu0 0.0
        %519 = vmatprep.subr.mxu0 0.0
        %520 = vmatpush1.msra.mxu0 0.0
        %521 = vmatprep.subr.mxu0 0.0
        %522 = vmatpush1.msra.mxu0 0.0
        %523 = vmatprep.subr.mxu0 0.0
        %524 = vmatpush1.msra.mxu0 0.0
        %525 = vmatprep.subr.mxu0 0.0
        %526 = vmatpush1.msra.mxu0 0.0
        %527 = vmatprep.subr.mxu0 0.0
        %528 = vmatpush1.msra.mxu0 0.0
        %529 = vmatprep.mubr.f32.mxu0 0.0
        %530 = vmatmul.mubr.f32.gmra.mrb[0].mxu0 %v366
        %v531 = vpop.f32.mrb[0].mxu0
        %v532 = vadd.f32 %v463, %v531
        %v533 = vpop.f32.mrb[0].mxu0
        %534 = vmatprep.mubr.f32.mxu0 0.0
        %535 = vmatmul.mubr.f32.gmra.mrb[0].mxu0 %v369
        %v536 = vpop.f32.mrb[0].mxu0
        %v537 = vadd.f32 %v463, %v536
        %v538 = vpop.f32.mrb[0].mxu0
        %539 = vdwg.mxu0
        %v540 = vsub.f32 0.0, %v532
        %v541 = vsub.f32 0.0, %v537
        %v542 = vmul.f32 %v540, 1.442695
        %v543 = vpow.pop %v542
        %v544 = vmul.f32 %v541, 1.442695
        %v545 = vpow.pop %v544
        %v546 = vadd.f32 %v543, 1.0
        %v547 = vadd.f32 %v545, 1.0
        %v548 = vrcp.pop %v546
        %v549 = vrcp.pop %v547
        %v550 = vmul.f32 %v438, %v548
        %v551 = vmul.f32 %v443, %v549
        %552 = vst.msk [vmem:[%s284] sm:$0xff] %vm303, %v550
        %553 = vst.msk [vmem:[%s284 + $0x8] sm:$0xff] %vm303, %v551
        %s554 = sand.u32 %s180, 1
        %s555 = scalar_lea.sflag [#allocation5], %s554
        %s556 = sand.u32 %s180, 1
        %s557 = smul.addr %s556, 16
        %s558 = scalar_lea.vmem [#allocation4], %s557
        // Predicated region
        $region45: #{glu_forward.3} parent=43 // pred_check
          %p559 = pneg %p190
        $region46: #{glu_forward.3} parent=43 // pred_check_branch
          %561 = sbr.rel (%p559) target = $region48
        $region47: #{glu_forward.3} parent=43 // pred_region
          %s562 = smul.u32 2, %s25
          %s564 = ssub.s32 256, 256
          %565 = vsyncadd %s555, %s564
          %s566 = smul.addr %s24, 4
          %s567 = sadd.s32 %s562, %s566
          %s568 = smul.addr %s567, 128
          %s569 = scalar_lea.hbm %s6, %s568
          %s570 = sshll.u32 %s558, 4
          %s571 = int_to_ptr.vmem [resolvable:$true] %s570
          %576 = dma.vmem_to_hbm [thread:$0]  %s571, 256, %s569, %s555, 128, 128, 8
        $region48: #{glu_forward.3} parent=43 // pred_fallthru
          _
      $region44: #{glu_forward.3} parent=5 // pred_fallthru
        _
      %p577 = scmp.le.s32.totalorder 2, %s15
      // Predicated region
      $region49: #{glu_forward.3} parent=5 // pred_check
        %p578 = pneg %p577
      $region50: #{glu_forward.3} parent=5 // pred_check_branch
        %580 = sbr.rel (%p578) target = $region52
      $region51: #{glu_forward.3} parent=5 // pred_region
        %s581 = ssub.s32 %s15, 2
        // Predicated region
        $region53: #{glu_forward.3} parent=51 // pred_check
          %p582 = pneg %p196
        $region54: #{glu_forward.3} parent=51 // pred_check_branch
          %584 = sbr.rel (%p582) target = $region56
        $region55: #{glu_forward.3} parent=51 // pred_region
          %s585 = sand.u32 %s181, 1
          %s586 = scalar_lea.sflag [#allocation5], %s585
          %s587 = sand.u32 %s181, 1
          %s588 = smul.addr %s587, 16
          %s589 = scalar_lea.vmem [#allocation4], %s588
          %590 = dma.done %s586, 256
        $region56: #{glu_forward.3} parent=51 // pred_fallthru
          _
      $region52: #{glu_forward.3} parent=5 // pred_fallthru
        _
    $region6: #{glu_forward.3} parent=1 // loop_footer
      %s19 = sadd.s32 1, %s15
    $region7: #{glu_forward.3} parent=1 // loop_footer_branch
      %14 = sbr.rel target = $region3
    $region8: #{glu_forward.3} parent=1 // loop_exit
      _
    %591 = vsyncpa [#allocation5], 1
    %s592 = scalar_lea.sflag [#allocation5], 1
    %593 = vsyncpa %s592, 1

</llo_original>
